<compile_context>
chip_gen: v7x
topology: tpu7x:2x2x1
jax: 0.10.0
libtpu: 0.0.40
codegen_flags: <defaults>
</compile_context>

<pallas_src>
import functools
import math

import jax
import jax.numpy as jnp
from jax.experimental import pallas as pl
from jax.experimental.pallas import tpu as pltpu


# ----------------------------------------------------------------------------
# Hardware budgets (queried once; conservative v7x-class defaults on failure).
# ----------------------------------------------------------------------------
@functools.lru_cache(maxsize=None)
def _hw_budgets():
    """Returns (tm_cap, working_set_budget_bytes, vmem_limit_bytes)."""
    vmem_phys = 64 << 20  # conservative default (v7x-class: 64 MiB per TC)
    try:
        vmem_phys = int(pltpu.get_tpu_info().vmem_capacity_bytes)
    except Exception:
        pass
    if vmem_phys >= (128 << 20):           # v5e / v6e: 128 MiB physical VMEM
        return 1024, 72 << 20, 100 << 20
    return 512, 36 << 20, 48 << 20         # v7x-class: 64 MiB physical VMEM


def _round_up(n, m):
    return ((n + m - 1) // m) * m


def _working_set_bytes(tm, K, Np, out_itemsize):
    # x: bf16 double-buffered; w: bf16, block index constant so it is DMA'd
    # once, but two buffers are still allocated; out: double-buffered.
    return 2 * tm * K * 2 + 2 * K * Np * 2 + 2 * tm * Np * out_itemsize


def _choose_tm(M, K, Np, out_itemsize):
    """Pick (tm, padded_M): big, multiple-of-8 tiles, never a tm=8 cliff."""
    tm_cap, budget, _ = _hw_budgets()
    eff_cap = tm_cap
    while eff_cap > 128 and _working_set_bytes(eff_cap, K, Np, out_itemsize) > budget:
        eff_cap //= 2
    if M <= eff_cap:
        tm = _round_up(M, 8)               # single M block, <=7 rows of padding
        return tm, tm
    m128 = _round_up(M, 128)
    for tm in (1024, 768, 512, 384, 256, 128):
        if tm <= eff_cap and m128 % tm == 0:
            return tm, m128
    tm = eff_cap                           # awkward M: pad up to a big tile
    return tm, _round_up(M, tm)


# ----------------------------------------------------------------------------
# Pallas kernel: single-pass GEMM with fused (optional) ReLU epilogue.
# ----------------------------------------------------------------------------
def _matmul_kernel(x_ref, w_ref, o_ref, *, apply_relu):
    acc = jnp.dot(x_ref[...], w_ref[...], preferred_element_type=jnp.float32)
    if apply_relu:
        acc = jnp.maximum(acc, 0.0)
    o_ref[...] = acc.astype(o_ref.dtype)


def pallas_matmul(x, w, *, relu=False, out_dtype=jnp.float32):
    """(M, K) @ (K, N) -> (M, N) with optional fused ReLU.

    bf16 inputs, f32 MXU accumulation, full-K and full-N blocks (weights are
    VMEM-resident across the whole 1-D M grid).  Small problems (K < 128 or
    M < 128) fall back to XLA's fused dot.
    """
    M, K = x.shape
    K2, N = w.shape
    assert K == K2

    x = x.astype(jnp.bfloat16)
    w = w.astype(jnp.bfloat16)

    # Tiny-K stem and tiny-M deep layers: pallas_call launch + pipeline
    # prologue and MXU underfill dominate; XLA's fused dot is strictly cheaper.
    if K < 128 or M < 128:
        y = jnp.einsum("mk,kn->mn", x, w, preferred_element_type=jnp.float32)
        if relu:
            y = jnp.maximum(y, 0.0)
        return y.astype(out_dtype)

    out_itemsize = jnp.dtype(out_dtype).itemsize
    Np = _round_up(N, 128)                 # no-op for every layer of this net
    tm, Mp = _choose_tm(M, K, Np, out_itemsize)

    xp = x if Mp == M else jnp.pad(x, ((0, Mp - M), (0, 0)))
    wp = w if Np == N else jnp.pad(w, ((0, 0), (0, Np - N)))

    _, _, vmem_limit = _hw_budgets()

    cost = pl.CostEstimate(
        flops=2 * Mp * K * Np,
        transcendentals=0,
        # post-layout traffic: x read once, weights read once (constant block
        # index -> a single DMA), output written once.
        bytes_accessed=int(Mp * K * 2 + K * Np * 2 + Mp * Np * out_itemsize),
    )

    out = pl.pallas_call(
        functools.partial(_matmul_kernel, apply_relu=relu),
        out_shape=jax.ShapeDtypeStruct((Mp, Np), out_dtype),
        grid_spec=pltpu.PrefetchScalarGridSpec(
            num_scalar_prefetch=0,
            grid=(Mp // tm,),
            in_specs=[
                pl.BlockSpec((tm, K), lambda i: (i, 0)),
                # full (K, N) weight with a constant index map: fetched once,
                # resident in VMEM for the whole grid.
                pl.BlockSpec((K, Np), lambda i: (0, 0)),
            ],
            out_specs=pl.BlockSpec((tm, Np), lambda i: (i, 0)),
        ),
        compiler_params=pltpu.CompilerParams(
            dimension_semantics=("parallel",),
            vmem_limit_bytes=vmem_limit,
        ),
        cost_estimate=cost,
    )(xp, wp)

    if Mp != M or Np != N:
        out = out[:M, :N]
    return out


def conv1x1_nhwc(x_nhwc, w_ic_oc, *, stride=1, relu=False, out_dtype=jnp.float32):
    """Bias-free 1x1 conv on channels-last input, computed as a Pallas GEMM."""
    if stride != 1:
        # TODO(synk): stride-2 subsampling belongs to the stand-in encoder only
        # (the module's own conv1/conv2/conv3 are stride 1); folding it into
        # the GEMM's BlockSpec indexing would save one HBM pass.
        x_nhwc = x_nhwc[:, ::stride, ::stride, :]
    n, h, w, c = x_nhwc.shape
    xm = x_nhwc.reshape(n * h * w, c)            # free row-major view (NHWC)
    ym = pallas_matmul(xm, w_ic_oc, relu=relu, out_dtype=out_dtype)
    return ym.reshape(n, h, w, w_ic_oc.shape[1])


# ----------------------------------------------------------------------------
# Deterministic parameter construction (shapes implied by the module __init__).
# Weights are stored pre-transposed as (C_in, C_out) and pre-cast to bf16.
# ----------------------------------------------------------------------------
def _init_w(key, c_in, c_out):
    scale = 1.0 / math.sqrt(c_in)
    w = jax.random.uniform(key, (c_in, c_out), jnp.float32,
                           minval=-scale, maxval=scale)
    return w.astype(jnp.bfloat16)


def make_params(in_ch=3):
    keys = jax.random.split(jax.random.PRNGKey(42), 7)
    return {
        # stand-in encoder projections (see TODO(synk) at top of file)
        "enc1": _init_w(keys[0], in_ch, 256),
        "enc2": _init_w(keys[1], 256, 512),
        "enc3": _init_w(keys[2], 512, 1024),
        "enc4": _init_w(keys[3], 1024, 2048),
        # the module's own conv1/conv2/conv3 (1x1, bias=False)
        "conv1": _init_w(keys[4], 512, 256),
        "conv2": _init_w(keys[5], 1024, 512),
        "conv3": _init_w(keys[6], 2048, 1024),
    }


# ----------------------------------------------------------------------------
# Forward pass
# ----------------------------------------------------------------------------
def triclops_forward(params, x_nchw, depth=False, bbox=False, planer=False):
    bf16 = jnp.bfloat16
    # single layout change at the module boundary: NCHW -> NHWC, f32 -> bf16
    x = jnp.transpose(x_nchw, (0, 2, 3, 1)).astype(bf16)

    # encoder (stand-in for _make_resnet_encoder(); channel contract only)
    layer_1 = conv1x1_nhwc(x, params["enc1"], stride=1, relu=True, out_dtype=bf16)
    layer_2 = conv1x1_nhwc(layer_1, params["enc2"], stride=2, relu=True, out_dtype=bf16)
    layer_3 = conv1x1_nhwc(layer_2, params["enc3"], stride=2, relu=True, out_dtype=bf16)
    layer_4 = conv1x1_nhwc(layer_3, params["enc4"], stride=2, relu=True, out_dtype=bf16)

    # the module's own heads (computed unconditionally, as in PyTorch); they
    # are kept channels-last (NHWC) — the module never returns them, and the
    # lane-sparse f32 NCHW transpose was a full extra HBM pass.
    yolo_0 = conv1x1_nhwc(layer_2, params["conv1"], out_dtype=jnp.float32)
    yolo_1 = conv1x1_nhwc(layer_3, params["conv2"], out_dtype=jnp.float32)
    yolo_2 = conv1x1_nhwc(layer_4, params["conv3"], out_dtype=jnp.float32)

    # TODO(synk): MidasDecoder / Darknet / MaskRCNN are external, undefined here.
    depth_out = None
    bbox_out = None
    plane_out = None

    # (plane_out, bbox_out, depth_out) matches the module's return exactly;
    # the NHWC Yolo intermediates are exposed for verification only.
    return (plane_out, bbox_out, depth_out), (yolo_0, yolo_1, yolo_2)


# ----------------------------------------------------------------------------
# Pure-JAX reference with matched numerics (bf16 inputs, f32 accumulation).
# ----------------------------------------------------------------------------
def _ref_conv1x1_nhwc(x_nhwc, w_ic_oc, stride=1, relu=False, out_dtype=jnp.float32):
    if stride != 1:
        x_nhwc = x_nhwc[:, ::stride, ::stride, :]
    y = jnp.einsum("nhwc,co->nhwo",
                   x_nhwc.astype(jnp.bfloat16), w_ic_oc.astype(jnp.bfloat16),
                   preferred_element_type=jnp.float32)
    if relu:
        y = jnp.maximum(y, 0.0)
    return y.astype(out_dtype)


# ----------------------------------------------------------------------------
if __name__ == "__main__":
    # SMALL deterministic input: batch=2, 3 channels, 16x16 image (NCHW).
    x = jax.random.normal(jax.random.PRNGKey(0), (2, 3, 16, 16), jnp.float32)
    params = make_params(in_ch=3)

    fwd = jax.jit(triclops_forward)
    (plane_out, bbox_out, depth_out), yolos = fwd(params, x)
    yolos = jax.block_until_ready(yolos)

    # sanity: module semantics with default flags
    assert plane_out is None and bbox_out is None and depth_out is None
    # NHWC Yolo intermediates
    assert yolos[0].shape == (2, 8, 8, 256)
    assert yolos[1].shape == (2, 4, 4, 512)
    assert yolos[2].shape == (2, 2, 2, 1024)

    # numerical check of the Pallas path against a pure-JAX reference
    bf16 = jnp.bfloat16
    xh = jnp.transpose(x, (0, 2, 3, 1)).astype(bf16)
    l1 = _ref_conv1x1_nhwc(xh, params["enc1"], relu=True, out_dtype=bf16)
    l2 = _ref_conv1x1_nhwc(l1, params["enc2"], stride=2, relu=True, out_dtype=bf16)
    l3 = _ref_conv1x1_nhwc(l2, params["enc3"], stride=2, relu=True, out_dtype=bf16)
    l4 = _ref_conv1x1_nhwc(l3, params["enc4"], stride=2, relu=True, out_dtype=bf16)
    ref_yolos = (
        _ref_conv1x1_nhwc(l2, params["conv1"]),
        _ref_conv1x1_nhwc(l3, params["conv2"]),
        _ref_conv1x1_nhwc(l4, params["conv3"]),
    )
    for got, ref in zip(yolos, ref_yolos):
        err = float(jnp.max(jnp.abs(got - ref)))
        assert jnp.allclose(got, ref, atol=5e-2, rtol=5e-2), err

    print("KERNEL_OK")
</pallas_src>

<mosaic_0001>
module attributes {stable_mosaic.version = 11 : i64} {
  func.func @_matmul_kernel(%arg0: i32, %arg1: memref<128x256xbf16, #tpu.memory_space<vmem>>, %arg2: memref<256x512xbf16, #tpu.memory_space<vmem>>, %arg3: memref<128x512xbf16, #tpu.memory_space<vmem>>) attributes {dimension_semantics = [#tpu.dimension_semantics<parallel>], iteration_bounds = array<i64: 1>, scalar_prefetch = 0 : i64, scratch_operands = 0 : i64, tpu.core_type = #tpu.core_type<tc>, window_params = [{transform_indices = @transform_0, window_bounds = array<i64: 128, 256>}, {pipeline_mode = #tpu.pipeline_mode<synchronous>, transform_indices = @transform_1, window_bounds = array<i64: 256, 512>}, {transform_indices = @transform_2, window_bounds = array<i64: 128, 512>}]} {
    %c0 = arith.constant 0 : index
    %c0_0 = arith.constant 0 : index
    %0 = vector.load %arg1[%c0, %c0_0] : memref<128x256xbf16, #tpu.memory_space<vmem>>, vector<128x256xbf16>
    %c0_1 = arith.constant 0 : index
    %c0_2 = arith.constant 0 : index
    %1 = vector.load %arg2[%c0_1, %c0_2] : memref<256x512xbf16, #tpu.memory_space<vmem>>, vector<256x512xbf16>
    %cst = arith.constant dense<0.000000e+00> : vector<128x512xf32>
    %2 = tpu.matmul %0, %1, %cst {dimension_numbers = #tpu.dot_dimension_numbers<[1], [0], [0], [1], [0, 0, 1, 1], [], []>} : vector<128x256xbf16>, vector<256x512xbf16>, vector<128x512xf32> -> vector<128x512xf32>
    %cst_3 = arith.constant 0.000000e+00 : f32
    %3 = vector.broadcast %cst_3 : f32 to vector<128x512xf32>
    %4 = arith.maximumf %2, %3 : vector<128x512xf32>
    %5 = arith.truncf %4 : vector<128x512xf32> to vector<128x512xbf16>
    %c0_4 = arith.constant 0 : index
    %c0_5 = arith.constant 0 : index
    %6 = vector.load %arg3[%c0_4, %c0_5] : memref<128x512xbf16, #tpu.memory_space<vmem>>, vector<128x512xbf16>
    tpu.vector_store %arg3[%c0_4, %c0_5], %5 {strides = array<i32>} : memref<128x512xbf16, #tpu.memory_space<vmem>>, vector<128x512xbf16>,
    return
  }
  func.func @transform_0(%arg0: i32) -> (i32, i32) {
    %c0_i32 = arith.constant 0 : i32
    %c0_i32_0 = arith.constant 0 : i32
    return %arg0, %c0_i32 : i32, i32
  }
  func.func @transform_1(%arg0: i32) -> (i32, i32) {
    %c0_i32 = arith.constant 0 : i32
    %c0_i32_0 = arith.constant 0 : i32
    %c0_i32_1 = arith.constant 0 : i32
    return %c0_i32, %c0_i32_0 : i32, i32
  }
  func.func @transform_2(%arg0: i32) -> (i32, i32) {
    %c0_i32 = arith.constant 0 : i32
    %c0_i32_0 = arith.constant 0 : i32
    return %arg0, %c0_i32 : i32, i32
  }
}

module attributes {stable_mosaic.version = 11 : i64} {
  func.func @_matmul_kernel(%arg0: i32, %arg1: memref<128x512xbf16, #tpu.memory_space<vmem>>, %arg2: memref<512x256xbf16, #tpu.memory_space<vmem>>, %arg3: memref<128x256xf32, #tpu.memory_space<vmem>>) attributes {dimension_semantics = [#tpu.dimension_semantics<parallel>], iteration_bounds = array<i64: 1>, scalar_prefetch = 0 : i64, scratch_operands = 0 : i64, tpu.core_type = #tpu.core_type<tc>, window_params = [{transform_indices = @transform_0, window_bounds = array<i64: 128, 512>}, {pipeline_mode = #tpu.pipeline_mode<synchronous>, transform_indices = @transform_1, window_bounds = array<i64: 512, 256>}, {transform_indices = @transform_2, window_bounds = array<i64: 128, 256>}]} {
    %c0 = arith.constant 0 : index
    %c0_0 = arith.constant 0 : index
    %0 = vector.load %arg1[%c0, %c0_0] : memref<128x512xbf16, #tpu.memory_space<vmem>>, vector<128x512xbf16>
    %c0_1 = arith.constant 0 : index
    %c0_2 = arith.constant 0 : index
    %1 = vector.load %arg2[%c0_1, %c0_2] : memref<512x256xbf16, #tpu.memory_space<vmem>>, vector<512x256xbf16>
    %cst = arith.constant dense<0.000000e+00> : vector<128x256xf32>
    %2 = tpu.matmul %0, %1, %cst {dimension_numbers = #tpu.dot_dimension_numbers<[1], [0], [0], [1], [0, 0, 1, 1], [], []>} : vector<128x512xbf16>, vector<512x256xbf16>, vector<128x256xf32> -> vector<128x256xf32>
    %c0_3 = arith.constant 0 : index
    %c0_4 = arith.constant 0 : index
    %3 = vector.load %arg3[%c0_3, %c0_4] : memref<128x256xf32, #tpu.memory_space<vmem>>, vector<128x256xf32>
    tpu.vector_store %arg3[%c0_3, %c0_4], %2 {strides = array<i32>} : memref<128x256xf32, #tpu.memory_space<vmem>>, vector<128x256xf32>,
    return
  }
  func.func @transform_0(%arg0: i32) -> (i32, i32) {
    %c0_i32 = arith.constant 0 : i32
    %c0_i32_0 = arith.constant 0 : i32
    return %arg0, %c0_i32 : i32, i32
  }
  func.func @transform_1(%arg0: i32) -> (i32, i32) {
    %c0_i32 = arith.constant 0 : i32
    %c0_i32_0 = arith.constant 0 : i32
    %c0_i32_1 = arith.constant 0 : i32
    return %c0_i32, %c0_i32_0 : i32, i32
  }
  func.func @transform_2(%arg0: i32) -> (i32, i32) {
    %c0_i32 = arith.constant 0 : i32
    %c0_i32_0 = arith.constant 0 : i32
    return %arg0, %c0_i32 : i32, i32
  }
}

</mosaic_0001>

<llo_original>
// kernel: triclops_forward.3
$region0: #{triclops_forward.3}
  #allocation0 [shape = 'u32[]', space=smem, size = 0x4, offset = 0x4, fixed_abs, tag = 'smem constant byte address 0x4 - core index']
  #allocation1 [shape = 'u32[144,128]{1,0:T(1,128)}', space=vmem, size = 0x12000, scoped, tag = 'internal scratch']
  %s0 = inlined_call_operand.vmem [shape: bf16[128,512], index: 0, kind: input, shape index: {}]
  %s1 = inlined_call_operand.hbm [shape: bf16[512,256], index: 1, kind: input, shape index: {}]
  %s2 = inlined_call_operand.hbm [shape: f32[128,256], index: 2, kind: output, shape index: {}]
  %s3 = sld [smem:[#allocation0]]
  $region22: #{triclops_forward.3} parent=0
    _
  %s5 = ssub.s32 1, %s3
  %s6 = scalar_select 0, %s5, %s3
  $region1: #{triclops_forward.3} parent=0
    #allocation2 [shape = 'u8[262144]{0}', space=vmem, size = 0x40000, scoped, tag = 'input window, operand 1, single buffered']
    #allocation3 [shape = 's32[1]{0}', space=sflag, size = 0x4, scoped, tag = 'scoped memory for triclops_forward.3']
    #allocation4 [shape = 's32[1]{0}', space=sflag, size = 0x4, scoped, tag = 'scoped memory for triclops_forward.3']
    #allocation5 [shape = 'u8[131072]{0}', space=vmem, size = 0x20000, scoped, tag = 'output window, operand 0, single buffered']
    %7 = vsyncpa [#allocation3], 0
    %8 = vsyncpa [#allocation4], 0
    // Predicated region
    $region2: #{triclops_forward.3} parent=1 // pred_check
      _
    $region3: #{triclops_forward.3} parent=1 // pred_check_branch
      %10 = sbr.rel (0) target = $region5
    $region4: #{triclops_forward.3} parent=1 // pred_region
      _
    $region5: #{triclops_forward.3} parent=1 // pred_fallthru
      _
    // Predicated region
    $region6: #{triclops_forward.3} parent=1 // pred_check
      _
    $region7: #{triclops_forward.3} parent=1 // pred_check_branch
      %12 = sbr.rel (0) target = $region9
    $region8: #{triclops_forward.3} parent=1 // pred_region
      %s14 = ssub.s32 8192, 8192
      %15 = vsyncadd [#allocation3], %s14
      %s16 = sshll.u32 [#allocation2], 4
      %s17 = int_to_ptr.vmem [resolvable:$true] %s16
      %22 = dma.hbm_to_vmem [thread:$0]  %s1, 8192, %s17, [#allocation3], 128, 128, 8
    $region9: #{triclops_forward.3} parent=1 // pred_fallthru
      _
    // Predicated region
    $region10: #{triclops_forward.3} parent=1 // pred_check
      _
    $region11: #{triclops_forward.3} parent=1 // pred_check_branch
      %24 = sbr.rel (0) target = $region13
    $region12: #{triclops_forward.3} parent=1 // pred_region
      %25 = dma.done [#allocation3], 8192
    $region13: #{triclops_forward.3} parent=1 // pred_fallthru
      _
    %v26 = vld [vmem:[%s0] sm:$0xff]
    %v27 = vld [vmem:[%s0 + $0x8] sm:$0xff]
    %v28 = vld [vmem:[%s0 + $0x10] sm:$0xff]
    %v29 = vld [vmem:[%s0 + $0x18] sm:$0xff]
    %v30 = vld [vmem:[%s0 + $0x20] sm:$0xff]
    %v31 = vld [vmem:[%s0 + $0x28] sm:$0xff]
    %v32 = vld [vmem:[%s0 + $0x30] sm:$0xff]
    %v33 = vld [vmem:[%s0 + $0x38] sm:$0xff]
    %v34 = vld [vmem:[%s0 + $0x40] sm:$0xff]
    %v35 = vld [vmem:[%s0 + $0x48] sm:$0xff]
    %v36 = vld [vmem:[%s0 + $0x50] sm:$0xff]
    %v37 = vld [vmem:[%s0 + $0x58] sm:$0xff]
    %v38 = vld [vmem:[%s0 + $0x60] sm:$0xff]
    %v39 = vld [vmem:[%s0 + $0x68] sm:$0xff]
    %v40 = vld [vmem:[%s0 + $0x70] sm:$0xff]
    %v41 = vld [vmem:[%s0 + $0x78] sm:$0xff]
    %v42 = vld [vmem:[%s0 + $0x80] sm:$0xff]
    %v43 = vld [vmem:[%s0 + $0x88] sm:$0xff]
    %v44 = vld [vmem:[%s0 + $0x90] sm:$0xff]
    %v45 = vld [vmem:[%s0 + $0x98] sm:$0xff]
    %v46 = vld [vmem:[%s0 + $0xa0] sm:$0xff]
    %v47 = vld [vmem:[%s0 + $0xa8] sm:$0xff]
    %v48 = vld [vmem:[%s0 + $0xb0] sm:$0xff]
    %v49 = vld [vmem:[%s0 + $0xb8] sm:$0xff]
    %v50 = vld [vmem:[%s0 + $0xc0] sm:$0xff]
    %v51 = vld [vmem:[%s0 + $0xc8] sm:$0xff]
    %v52 = vld [vmem:[%s0 + $0xd0] sm:$0xff]
    %v53 = vld [vmem:[%s0 + $0xd8] sm:$0xff]
    %v54 = vld [vmem:[%s0 + $0xe0] sm:$0xff]
    %v55 = vld [vmem:[%s0 + $0xe8] sm:$0xff]
    %v56 = vld [vmem:[%s0 + $0xf0] sm:$0xff]
    %v57 = vld [vmem:[%s0 + $0xf8] sm:$0xff]
    %v58 = vld [vmem:[#allocation2] sm:$0xff]
    %v59 = vld [vmem:[#allocation2 + $0x8] sm:$0xff]
    %v60 = vld [vmem:[#allocation2 + $0x10] sm:$0xff]
    %v61 = vld [vmem:[#allocation2 + $0x18] sm:$0xff]
    %v62 = vld [vmem:[#allocation2 + $0x20] sm:$0xff]
    %v63 = vld [vmem:[#allocation2 + $0x28] sm:$0xff]
    %v64 = vld [vmem:[#allocation2 + $0x30] sm:$0xff]
    %v65 = vld [vmem:[#allocation2 + $0x38] sm:$0xff]
    %v66 = vld [vmem:[#allocation2 + $0x40] sm:$0xff]
    %v67 = vld [vmem:[#allocation2 + $0x48] sm:$0xff]
    %v68 = vld [vmem:[#allocation2 + $0x50] sm:$0xff]
    %v69 = vld [vmem:[#allocation2 + $0x58] sm:$0xff]
    %v70 = vld [vmem:[#allocation2 + $0x60] sm:$0xff]
    %v71 = vld [vmem:[#allocation2 + $0x68] sm:$0xff]
    %v72 = vld [vmem:[#allocation2 + $0x70] sm:$0xff]
    %v73 = vld [vmem:[#allocation2 + $0x78] sm:$0xff]
    %v74 = vld [vmem:[#allocation2 + $0x80] sm:$0xff]
    %v75 = vld [vmem:[#allocation2 + $0x88] sm:$0xff]
    %v76 = vld [vmem:[#allocation2 + $0x90] sm:$0xff]
    %v77 = vld [vmem:[#allocation2 + $0x98] sm:$0xff]
    %v78 = vld [vmem:[#allocation2 + $0xa0] sm:$0xff]
    %v79 = vld [vmem:[#allocation2 + $0xa8] sm:$0xff]
    %v80 = vld [vmem:[#allocation2 + $0xb0] sm:$0xff]
    %v81 = vld [vmem:[#allocation2 + $0xb8] sm:$0xff]
    %v82 = vld [vmem:[#allocation2 + $0xc0] sm:$0xff]
    %v83 = vld [vmem:[#allocation2 + $0xc8] sm:$0xff]
    %v84 = vld [vmem:[#allocation2 + $0xd0] sm:$0xff]
    %v85 = vld [vmem:[#allocation2 + $0xd8] sm:$0xff]
    %v86 = vld [vmem:[#allocation2 + $0xe0] sm:$0xff]
    %v87 = vld [vmem:[#allocation2 + $0xe8] sm:$0xff]
    %v88 = vld [vmem:[#allocation2 + $0xf0] sm:$0xff]
    %v89 = vld [vmem:[#allocation2 + $0xf8] sm:$0xff]
    %v90 = vld [vmem:[#allocation2 + $0x100] sm:$0xff]
    %v91 = vld [vmem:[#allocation2 + $0x108] sm:$0xff]
    %v92 = vld [vmem:[#allocation2 + $0x110] sm:$0xff]
    %v93 = vld [vmem:[#allocation2 + $0x118] sm:$0xff]
    %v94 = vld [vmem:[#allocation2 + $0x120] sm:$0xff]
    %v95 = vld [vmem:[#allocation2 + $0x128] sm:$0xff]
    %v96 = vld [vmem:[#allocation2 + $0x130] sm:$0xff]
    %v97 = vld [vmem:[#allocation2 + $0x138] sm:$0xff]
    %v98 = vld [vmem:[#allocation2 + $0x140] sm:$0xff]
    %v99 = vld [vmem:[#allocation2 + $0x148] sm:$0xff]
    %v100 = vld [vmem:[#allocation2 + $0x150] sm:$0xff]
    %v101 = vld [vmem:[#allocation2 + $0x158] sm:$0xff]
    %v102 = vld [vmem:[#allocation2 + $0x160] sm:$0xff]
    %v103 = vld [vmem:[#allocation2 + $0x168] sm:$0xff]
    %v104 = vld [vmem:[#allocation2 + $0x170] sm:$0xff]
    %v105 = vld [vmem:[#allocation2 + $0x178] sm:$0xff]
    %v106 = vld [vmem:[#allocation2 + $0x180] sm:$0xff]
    %v107 = vld [vmem:[#allocation2 + $0x188] sm:$0xff]
    %v108 = vld [vmem:[#allocation2 + $0x190] sm:$0xff]
    %v109 = vld [vmem:[#allocation2 + $0x198] sm:$0xff]
    %v110 = vld [vmem:[#allocation2 + $0x1a0] sm:$0xff]
    %v111 = vld [vmem:[#allocation2 + $0x1a8] sm:$0xff]
    %v112 = vld [vmem:[#allocation2 + $0x1b0] sm:$0xff]
    %v113 = vld [vmem:[#allocation2 + $0x1b8] sm:$0xff]
    %v114 = vld [vmem:[#allocation2 + $0x1c0] sm:$0xff]
    %v115 = vld [vmem:[#allocation2 + $0x1c8] sm:$0xff]
    %v116 = vld [vmem:[#allocation2 + $0x1d0] sm:$0xff]
    %v117 = vld [vmem:[#allocation2 + $0x1d8] sm:$0xff]
    %v118 = vld [vmem:[#allocation2 + $0x1e0] sm:$0xff]
    %v119 = vld [vmem:[#allocation2 + $0x1e8] sm:$0xff]
    %v120 = vld [vmem:[#allocation2 + $0x1f0] sm:$0xff]
    %v121 = vld [vmem:[#allocation2 + $0x1f8] sm:$0xff]
    %v154 = vunpack.c.l.b16 %v26
    %v155 = vunpack.c.h.b16 %v26
    %v156 = vunpack.c.l.b16 %v27
    %v157 = vunpack.c.h.b16 %v27
    %v158 = vunpack.c.l.b16 %v28
    %v159 = vunpack.c.h.b16 %v28
    %v160 = vunpack.c.l.b16 %v29
    %v161 = vunpack.c.h.b16 %v29
    %v162 = vunpack.c.l.b16 %v30
    %v163 = vunpack.c.h.b16 %v30
    %v164 = vunpack.c.l.b16 %v31
    %v165 = vunpack.c.h.b16 %v31
    %v166 = vunpack.c.l.b16 %v32
    %v167 = vunpack.c.h.b16 %v32
    %v168 = vunpack.c.l.b16 %v33
    %v169 = vunpack.c.h.b16 %v33
    %v170 = vunpack.c.l.b16 %v34
    %v171 = vunpack.c.h.b16 %v34
    %v172 = vunpack.c.l.b16 %v35
    %v173 = vunpack.c.h.b16 %v35
    %v174 = vunpack.c.l.b16 %v36
    %v175 = vunpack.c.h.b16 %v36
    %v176 = vunpack.c.l.b16 %v37
    %v177 = vunpack.c.h.b16 %v37
    %v178 = vunpack.c.l.b16 %v38
    %v179 = vunpack.c.h.b16 %v38
    %v180 = vunpack.c.l.b16 %v39
    %v181 = vunpack.c.h.b16 %v39
    %v182 = vunpack.c.l.b16 %v40
    %v183 = vunpack.c.h.b16 %v40
    %v184 = vunpack.c.l.b16 %v41
    %v185 = vunpack.c.h.b16 %v41
    %v186 = vunpack.c.l.b16 %v42
    %v187 = vunpack.c.h.b16 %v42
    %v188 = vunpack.c.l.b16 %v43
    %v189 = vunpack.c.h.b16 %v43
    %v190 = vunpack.c.l.b16 %v44
    %v191 = vunpack.c.h.b16 %v44
    %v192 = vunpack.c.l.b16 %v45
    %v193 = vunpack.c.h.b16 %v45
    %v194 = vunpack.c.l.b16 %v46
    %v195 = vunpack.c.h.b16 %v46
    %v196 = vunpack.c.l.b16 %v47
    %v197 = vunpack.c.h.b16 %v47
    %v198 = vunpack.c.l.b16 %v48
    %v199 = vunpack.c.h.b16 %v48
    %v200 = vunpack.c.l.b16 %v49
    %v201 = vunpack.c.h.b16 %v49
    %v202 = vunpack.c.l.b16 %v50
    %v203 = vunpack.c.h.b16 %v50
    %v204 = vunpack.c.l.b16 %v51
    %v205 = vunpack.c.h.b16 %v51
    %v206 = vunpack.c.l.b16 %v52
    %v207 = vunpack.c.h.b16 %v52
    %v208 = vunpack.c.l.b16 %v53
    %v209 = vunpack.c.h.b16 %v53
    %v210 = vunpack.c.l.b16 %v54
    %v211 = vunpack.c.h.b16 %v54
    %v212 = vunpack.c.l.b16 %v55
    %v213 = vunpack.c.h.b16 %v55
    %v214 = vunpack.c.l.b16 %v56
    %v215 = vunpack.c.h.b16 %v56
    %v216 = vunpack.c.l.b16 %v57
    %v217 = vunpack.c.h.b16 %v57
    %v218 = vpack.c.b16 %v158, %v154
    %v219 = vpack.c.b16 %v159, %v155
    %v220 = vpack.c.b16 %v160, %v156
    %v221 = vpack.c.b16 %v161, %v157
    %v222 = vpack.c.b16 %v166, %v162
    %v223 = vpack.c.b16 %v167, %v163
    %v224 = vpack.c.b16 %v168, %v164
    %v225 = vpack.c.b16 %v169, %v165
    %v226 = vpack.c.b16 %v174, %v170
    %v227 = vpack.c.b16 %v175, %v171
    %v228 = vpack.c.b16 %v176, %v172
    %v229 = vpack.c.b16 %v177, %v173
    %v230 = vpack.c.b16 %v182, %v178
    %v231 = vpack.c.b16 %v183, %v179
    %v232 = vpack.c.b16 %v184, %v180
    %v233 = vpack.c.b16 %v185, %v181
    %v234 = vpack.c.b16 %v190, %v186
    %v235 = vpack.c.b16 %v191, %v187
    %v236 = vpack.c.b16 %v192, %v188
    %v237 = vpack.c.b16 %v193, %v189
    %v238 = vpack.c.b16 %v198, %v194
    %v239 = vpack.c.b16 %v199, %v195
    %v240 = vpack.c.b16 %v200, %v196
    %v241 = vpack.c.b16 %v201, %v197
    %v242 = vpack.c.b16 %v206, %v202
    %v243 = vpack.c.b16 %v207, %v203
    %v244 = vpack.c.b16 %v208, %v204
    %v245 = vpack.c.b16 %v209, %v205
    %v246 = vpack.c.b16 %v214, %v210
    %v247 = vpack.c.b16 %v215, %v211
    %v248 = vpack.c.b16 %v216, %v212
    %v249 = vpack.c.b16 %v217, %v213
    %v346 = vunpack.c.l.b16 %v58
    %v347 = vunpack.c.h.b16 %v58
    %v348 = vunpack.c.l.b16 %v59
    %v349 = vunpack.c.h.b16 %v59
    %v350 = vunpack.c.l.b16 %v60
    %v351 = vunpack.c.h.b16 %v60
    %v352 = vunpack.c.l.b16 %v61
    %v353 = vunpack.c.h.b16 %v61
    %v354 = vunpack.c.l.b16 %v62
    %v355 = vunpack.c.h.b16 %v62
    %v356 = vunpack.c.l.b16 %v63
    %v357 = vunpack.c.h.b16 %v63
    %v358 = vunpack.c.l.b16 %v64
    %v359 = vunpack.c.h.b16 %v64
    %v360 = vunpack.c.l.b16 %v65
    %v361 = vunpack.c.h.b16 %v65
    %v362 = vunpack.c.l.b16 %v66
    %v363 = vunpack.c.h.b16 %v66
    %v364 = vunpack.c.l.b16 %v67
    %v365 = vunpack.c.h.b16 %v67
    %v366 = vunpack.c.l.b16 %v68
    %v367 = vunpack.c.h.b16 %v68
    %v368 = vunpack.c.l.b16 %v69
    %v369 = vunpack.c.h.b16 %v69
    %v370 = vunpack.c.l.b16 %v70
    %v371 = vunpack.c.h.b16 %v70
    %v372 = vunpack.c.l.b16 %v71
    %v373 = vunpack.c.h.b16 %v71
    %v374 = vunpack.c.l.b16 %v72
    %v375 = vunpack.c.h.b16 %v72
    %v376 = vunpack.c.l.b16 %v73
    %v377 = vunpack.c.h.b16 %v73
    %v378 = vunpack.c.l.b16 %v74
    %v379 = vunpack.c.h.b16 %v74
    %v380 = vunpack.c.l.b16 %v75
    %v381 = vunpack.c.h.b16 %v75
    %v382 = vunpack.c.l.b16 %v76
    %v383 = vunpack.c.h.b16 %v76
    %v384 = vunpack.c.l.b16 %v77
    %v385 = vunpack.c.h.b16 %v77
    %v386 = vunpack.c.l.b16 %v78
    %v387 = vunpack.c.h.b16 %v78
    %v388 = vunpack.c.l.b16 %v79
    %v389 = vunpack.c.h.b16 %v79
    %v390 = vunpack.c.l.b16 %v80
    %v391 = vunpack.c.h.b16 %v80
    %v392 = vunpack.c.l.b16 %v81
    %v393 = vunpack.c.h.b16 %v81
    %v394 = vunpack.c.l.b16 %v82
    %v395 = vunpack.c.h.b16 %v82
    %v396 = vunpack.c.l.b16 %v83
    %v397 = vunpack.c.h.b16 %v83
    %v398 = vunpack.c.l.b16 %v84
    %v399 = vunpack.c.h.b16 %v84
    %v400 = vunpack.c.l.b16 %v85
    %v401 = vunpack.c.h.b16 %v85
    %v402 = vunpack.c.l.b16 %v86
    %v403 = vunpack.c.h.b16 %v86
    %v404 = vunpack.c.l.b16 %v87
    %v405 = vunpack.c.h.b16 %v87
    %v406 = vunpack.c.l.b16 %v88
    %v407 = vunpack.c.h.b16 %v88
    %v408 = vunpack.c.l.b16 %v89
    %v409 = vunpack.c.h.b16 %v89
    %v410 = vunpack.c.l.b16 %v90
    %v411 = vunpack.c.h.b16 %v90
    %v412 = vunpack.c.l.b16 %v91
    %v413 = vunpack.c.h.b16 %v91
    %v414 = vunpack.c.l.b16 %v92
    %v415 = vunpack.c.h.b16 %v92
    %v416 = vunpack.c.l.b16 %v93
    %v417 = vunpack.c.h.b16 %v93
    %v418 = vunpack.c.l.b16 %v94
    %v419 = vunpack.c.h.b16 %v94
    %v420 = vunpack.c.l.b16 %v95
    %v421 = vunpack.c.h.b16 %v95
    %v422 = vunpack.c.l.b16 %v96
    %v423 = vunpack.c.h.b16 %v96
    %v424 = vunpack.c.l.b16 %v97
    %v425 = vunpack.c.h.b16 %v97
    %v426 = vunpack.c.l.b16 %v98
    %v427 = vunpack.c.h.b16 %v98
    %v428 = vunpack.c.l.b16 %v99
    %v429 = vunpack.c.h.b16 %v99
    %v430 = vunpack.c.l.b16 %v100
    %v431 = vunpack.c.h.b16 %v100
    %v432 = vunpack.c.l.b16 %v101
    %v433 = vunpack.c.h.b16 %v101
    %v434 = vunpack.c.l.b16 %v102
    %v435 = vunpack.c.h.b16 %v102
    %v436 = vunpack.c.l.b16 %v103
    %v437 = vunpack.c.h.b16 %v103
    %v438 = vunpack.c.l.b16 %v104
    %v439 = vunpack.c.h.b16 %v104
    %v440 = vunpack.c.l.b16 %v105
    %v441 = vunpack.c.h.b16 %v105
    %v442 = vunpack.c.l.b16 %v106
    %v443 = vunpack.c.h.b16 %v106
    %v444 = vunpack.c.l.b16 %v107
    %v445 = vunpack.c.h.b16 %v107
    %v446 = vunpack.c.l.b16 %v108
    %v447 = vunpack.c.h.b16 %v108
    %v448 = vunpack.c.l.b16 %v109
    %v449 = vunpack.c.h.b16 %v109
    %v450 = vunpack.c.l.b16 %v110
    %v451 = vunpack.c.h.b16 %v110
    %v452 = vunpack.c.l.b16 %v111
    %v453 = vunpack.c.h.b16 %v111
    %v454 = vunpack.c.l.b16 %v112
    %v455 = vunpack.c.h.b16 %v112
    %v456 = vunpack.c.l.b16 %v113
    %v457 = vunpack.c.h.b16 %v113
    %v458 = vunpack.c.l.b16 %v114
    %v459 = vunpack.c.h.b16 %v114
    %v460 = vunpack.c.l.b16 %v115
    %v461 = vunpack.c.h.b16 %v115
    %v462 = vunpack.c.l.b16 %v116
    %v463 = vunpack.c.h.b16 %v116
    %v464 = vunpack.c.l.b16 %v117
    %v465 = vunpack.c.h.b16 %v117
    %v466 = vunpack.c.l.b16 %v118
    %v467 = vunpack.c.h.b16 %v118
    %v468 = vunpack.c.l.b16 %v119
    %v469 = vunpack.c.h.b16 %v119
    %v470 = vunpack.c.l.b16 %v120
    %v471 = vunpack.c.h.b16 %v120
    %v472 = vunpack.c.l.b16 %v121
    %v473 = vunpack.c.h.b16 %v121
    %v474 = vpack.c.b16 %v348, %v346
    %v475 = vpack.c.b16 %v349, %v347
    %v476 = vpack.c.b16 %v352, %v350
    %v477 = vpack.c.b16 %v353, %v351
    %v478 = vpack.c.b16 %v356, %v354
    %v479 = vpack.c.b16 %v357, %v355
    %v480 = vpack.c.b16 %v360, %v358
    %v481 = vpack.c.b16 %v361, %v359
    %v482 = vpack.c.b16 %v364, %v362
    %v483 = vpack.c.b16 %v365, %v363
    %v484 = vpack.c.b16 %v368, %v366
    %v485 = vpack.c.b16 %v369, %v367
    %v486 = vpack.c.b16 %v372, %v370
    %v487 = vpack.c.b16 %v373, %v371
    %v488 = vpack.c.b16 %v376, %v374
    %v489 = vpack.c.b16 %v377, %v375
    %v490 = vpack.c.b16 %v380, %v378
    %v491 = vpack.c.b16 %v381, %v379
    %v492 = vpack.c.b16 %v384, %v382
    %v493 = vpack.c.b16 %v385, %v383
    %v494 = vpack.c.b16 %v388, %v386
    %v495 = vpack.c.b16 %v389, %v387
    %v496 = vpack.c.b16 %v392, %v390
    %v497 = vpack.c.b16 %v393, %v391
    %v498 = vpack.c.b16 %v396, %v394
    %v499 = vpack.c.b16 %v397, %v395
    %v500 = vpack.c.b16 %v400, %v398
    %v501 = vpack.c.b16 %v401, %v399
    %v502 = vpack.c.b16 %v404, %v402
    %v503 = vpack.c.b16 %v405, %v403
    %v504 = vpack.c.b16 %v408, %v406
    %v505 = vpack.c.b16 %v409, %v407
    %v506 = vpack.c.b16 %v412, %v410
    %v507 = vpack.c.b16 %v413, %v411
    %v508 = vpack.c.b16 %v416, %v414
    %v509 = vpack.c.b16 %v417, %v415
    %v510 = vpack.c.b16 %v420, %v418
    %v511 = vpack.c.b16 %v421, %v419
    %v512 = vpack.c.b16 %v424, %v422
    %v513 = vpack.c.b16 %v425, %v423
    %v514 = vpack.c.b16 %v428, %v426
    %v515 = vpack.c.b16 %v429, %v427
    %v516 = vpack.c.b16 %v432, %v430
    %v517 = vpack.c.b16 %v433, %v431
    %v518 = vpack.c.b16 %v436, %v434
    %v519 = vpack.c.b16 %v437, %v435
    %v520 = vpack.c.b16 %v440, %v438
    %v521 = vpack.c.b16 %v441, %v439
    %v522 = vpack.c.b16 %v444, %v442
    %v523 = vpack.c.b16 %v445, %v443
    %v524 = vpack.c.b16 %v448, %v446
    %v525 = vpack.c.b16 %v449, %v447
    %v526 = vpack.c.b16 %v452, %v450
    %v527 = vpack.c.b16 %v453, %v451
    %v528 = vpack.c.b16 %v456, %v454
    %v529 = vpack.c.b16 %v457, %v455
    %v530 = vpack.c.b16 %v460, %v458
    %v531 = vpack.c.b16 %v461, %v459
    %v532 = vpack.c.b16 %v464, %v462
    %v533 = vpack.c.b16 %v465, %v463
    %v534 = vpack.c.b16 %v468, %v466
    %v535 = vpack.c.b16 %v469, %v467
    %v536 = vpack.c.b16 %v472, %v470
    %v537 = vpack.c.b16 %v473, %v471
    %602 = vmatprep.subr.bf16.mxu0 %v475
    %603 = vmatpush1.bf16.msra.mxu0 %v474
    %604 = vmatprep.subr.bf16.mxu0 %v477
    %605 = vmatpush1.bf16.msra.mxu0 %v476
    %606 = vmatprep.subr.bf16.mxu0 %v479
    %607 = vmatpush1.bf16.msra.mxu0 %v478
    %608 = vmatprep.subr.bf16.mxu0 %v481
    %609 = vmatpush1.bf16.msra.mxu0 %v480
    %610 = vmatprep.subr.bf16.mxu0 %v483
    %611 = vmatpush1.bf16.msra.mxu0 %v482
    %612 = vmatprep.subr.bf16.mxu0 %v485
    %613 = vmatpush1.bf16.msra.mxu0 %v484
    %614 = vmatprep.subr.bf16.mxu0 %v487
    %615 = vmatpush1.bf16.msra.mxu0 %v486
    %616 = vmatprep.subr.bf16.mxu0 %v489
    %617 = vmatpush1.bf16.msra.mxu0 %v488
    %618 = vmatprep.subr.bf16.mxu0 %v491
    %619 = vmatpush1.bf16.msra.mxu0 %v490
    %620 = vmatprep.subr.bf16.mxu0 %v493
    %621 = vmatpush1.bf16.msra.mxu0 %v492
    %622 = vmatprep.subr.bf16.mxu0 %v495
    %623 = vmatpush1.bf16.msra.mxu0 %v494
    %624 = vmatprep.subr.bf16.mxu0 %v497
    %625 = vmatpush1.bf16.msra.mxu0 %v496
    %626 = vmatprep.subr.bf16.mxu0 %v499
    %627 = vmatpush1.bf16.msra.mxu0 %v498
    %628 = vmatprep.subr.bf16.mxu0 %v501
    %629 = vmatpush1.bf16.msra.mxu0 %v500
    %630 = vmatprep.subr.bf16.mxu0 %v503
    %631 = vmatpush1.bf16.msra.mxu0 %v502
    %632 = vmatprep.subr.bf16.mxu0 %v505
    %633 = vmatpush1.bf16.msra.mxu0 %v504
    %634 = vmatprep.mubr.bf16.mxu0 %v219
    %635 = vmatmul.mubr.bf16.gmra.mrb[0].mxu0 %v218
    %v636 = vpop.f32.mrb[0].mxu0
    %v637 = vadd.f32 0.0, %v636
    %v638 = vpop.f32.mrb[0].mxu0
    %v639 = vadd.f32 0.0, %v638
    %v640 = vpop.f32.mrb[0].mxu0
    %v641 = vadd.f32 0.0, %v640
    %v642 = vpop.f32.mrb[0].mxu0
    %v643 = vadd.f32 0.0, %v642
    %644 = vmatprep.mubr.bf16.mxu0 %v223
    %645 = vmatmul.mubr.bf16.gmra.mrb[0].mxu0 %v222
    %v646 = vpop.f32.mrb[0].mxu0
    %v647 = vadd.f32 0.0, %v646
    %v648 = vpop.f32.mrb[0].mxu0
    %v649 = vadd.f32 0.0, %v648
    %v650 = vpop.f32.mrb[0].mxu0
    %v651 = vadd.f32 0.0, %v650
    %v652 = vpop.f32.mrb[0].mxu0
    %v653 = vadd.f32 0.0, %v652
    %654 = vmatprep.mubr.bf16.mxu0 %v227
    %655 = vmatmul.mubr.bf16.gmra.mrb[0].mxu0 %v226
    %v656 = vpop.f32.mrb[0].mxu0
    %v657 = vadd.f32 0.0, %v656
    %v658 = vpop.f32.mrb[0].mxu0
    %v659 = vadd.f32 0.0, %v658
    %v660 = vpop.f32.mrb[0].mxu0
    %v661 = vadd.f32 0.0, %v660
    %v662 = vpop.f32.mrb[0].mxu0
    %v663 = vadd.f32 0.0, %v662
    %664 = vmatprep.mubr.bf16.mxu0 %v231
    %665 = vmatmul.mubr.bf16.gmra.mrb[0].mxu0 %v230
    %v666 = vpop.f32.mrb[0].mxu0
    %v667 = vadd.f32 0.0, %v666
    %v668 = vpop.f32.mrb[0].mxu0
    %v669 = vadd.f32 0.0, %v668
    %v670 = vpop.f32.mrb[0].mxu0
    %v671 = vadd.f32 0.0, %v670
    %v672 = vpop.f32.mrb[0].mxu0
    %v673 = vadd.f32 0.0, %v672
    %674 = vmatprep.mubr.bf16.mxu0 %v235
    %675 = vmatmul.mubr.bf16.gmra.mrb[0].mxu0 %v234
    %v676 = vpop.f32.mrb[0].mxu0
    %v677 = vadd.f32 0.0, %v676
    %v678 = vpop.f32.mrb[0].mxu0
    %v679 = vadd.f32 0.0, %v678
    %v680 = vpop.f32.mrb[0].mxu0
    %v681 = vadd.f32 0.0, %v680
    %v682 = vpop.f32.mrb[0].mxu0
    %v683 = vadd.f32 0.0, %v682
    %684 = vmatprep.mubr.bf16.mxu0 %v239
    %685 = vmatmul.mubr.bf16.gmra.mrb[0].mxu0 %v238
    %v686 = vpop.f32.mrb[0].mxu0
    %v687 = vadd.f32 0.0, %v686
    %v688 = vpop.f32.mrb[0].mxu0
    %v689 = vadd.f32 0.0, %v688
    %v690 = vpop.f32.mrb[0].mxu0
    %v691 = vadd.f32 0.0, %v690
    %v692 = vpop.f32.mrb[0].mxu0
    %v693 = vadd.f32 0.0, %v692
    %694 = vmatprep.mubr.bf16.mxu0 %v243
    %695 = vmatmul.mubr.bf16.gmra.mrb[0].mxu0 %v242
    %v696 = vpop.f32.mrb[0].mxu0
    %v697 = vadd.f32 0.0, %v696
    %v698 = vpop.f32.mrb[0].mxu0
    %v699 = vadd.f32 0.0, %v698
    %v700 = vpop.f32.mrb[0].mxu0
    %v701 = vadd.f32 0.0, %v700
    %v702 = vpop.f32.mrb[0].mxu0
    %v703 = vadd.f32 0.0, %v702
    %704 = vmatprep.mubr.bf16.mxu0 %v247
    %705 = vmatmul.mubr.bf16.gmra.mrb[0].mxu0 %v246
    %v706 = vpop.f32.mrb[0].mxu0
    %v707 = vadd.f32 0.0, %v706
    %v708 = vpop.f32.mrb[0].mxu0
    %v709 = vadd.f32 0.0, %v708
    %v710 = vpop.f32.mrb[0].mxu0
    %v711 = vadd.f32 0.0, %v710
    %v712 = vpop.f32.mrb[0].mxu0
    %v713 = vadd.f32 0.0, %v712
    %714 = vdwg.mxu0
    %715 = vmatprep.subr.bf16.mxu0 %v507
    %716 = vmatpush1.bf16.msra.mxu0 %v506
    %717 = vmatprep.subr.bf16.mxu0 %v509
    %718 = vmatpush1.bf16.msra.mxu0 %v508
    %719 = vmatprep.subr.bf16.mxu0 %v511
    %720 = vmatpush1.bf16.msra.mxu0 %v510
    %721 = vmatprep.subr.bf16.mxu0 %v513
    %722 = vmatpush1.bf16.msra.mxu0 %v512
    %723 = vmatprep.subr.bf16.mxu0 %v515
    %724 = vmatpush1.bf16.msra.mxu0 %v514
    %725 = vmatprep.subr.bf16.mxu0 %v517
    %726 = vmatpush1.bf16.msra.mxu0 %v516
    %727 = vmatprep.subr.bf16.mxu0 %v519
    %728 = vmatpush1.bf16.msra.mxu0 %v518
    %729 = vmatprep.subr.bf16.mxu0 %v521
    %730 = vmatpush1.bf16.msra.mxu0 %v520
    %731 = vmatprep.subr.bf16.mxu0 %v523
    %732 = vmatpush1.bf16.msra.mxu0 %v522
    %733 = vmatprep.subr.bf16.mxu0 %v525
    %734 = vmatpush1.bf16.msra.mxu0 %v524
    %735 = vmatprep.subr.bf16.mxu0 %v527
    %736 = vmatpush1.bf16.msra.mxu0 %v526
    %737 = vmatprep.subr.bf16.mxu0 %v529
    %738 = vmatpush1.bf16.msra.mxu0 %v528
    %739 = vmatprep.subr.bf16.mxu0 %v531
    %740 = vmatpush1.bf16.msra.mxu0 %v530
    %741 = vmatprep.subr.bf16.mxu0 %v533
    %742 = vmatpush1.bf16.msra.mxu0 %v532
    %743 = vmatprep.subr.bf16.mxu0 %v535
    %744 = vmatpush1.bf16.msra.mxu0 %v534
    %745 = vmatprep.subr.bf16.mxu0 %v537
    %746 = vmatpush1.bf16.msra.mxu0 %v536
    %747 = vmatprep.mubr.bf16.mxu0 %v221
    %748 = vmatmul.mubr.bf16.gmra.mrb[0].mxu0 %v220
    %v749 = vpop.f32.mrb[0].mxu0
    %v750 = vadd.f32 %v637, %v749
    %v751 = vpop.f32.mrb[0].mxu0
    %v752 = vadd.f32 %v639, %v751
    %v753 = vpop.f32.mrb[0].mxu0
    %v754 = vadd.f32 %v641, %v753
    %v755 = vpop.f32.mrb[0].mxu0
    %v756 = vadd.f32 %v643, %v755
    %757 = vmatprep.mubr.bf16.mxu0 %v225
    %758 = vmatmul.mubr.bf16.gmra.mrb[0].mxu0 %v224
    %v759 = vpop.f32.mrb[0].mxu0
    %v760 = vadd.f32 %v647, %v759
    %v761 = vpop.f32.mrb[0].mxu0
    %v762 = vadd.f32 %v649, %v761
    %v763 = vpop.f32.mrb[0].mxu0
    %v764 = vadd.f32 %v651, %v763
    %v765 = vpop.f32.mrb[0].mxu0
    %v766 = vadd.f32 %v653, %v765
    %767 = vmatprep.mubr.bf16.mxu0 %v229
    %768 = vmatmul.mubr.bf16.gmra.mrb[0].mxu0 %v228
    %v769 = vpop.f32.mrb[0].mxu0
    %v770 = vadd.f32 %v657, %v769
    %v771 = vpop.f32.mrb[0].mxu0
    %v772 = vadd.f32 %v659, %v771
    %v773 = vpop.f32.mrb[0].mxu0
    %v774 = vadd.f32 %v661, %v773
    %v775 = vpop.f32.mrb[0].mxu0
    %v776 = vadd.f32 %v663, %v775
    %777 = vmatprep.mubr.bf16.mxu0 %v233
    %778 = vmatmul.mubr.bf16.gmra.mrb[0].mxu0 %v232
    %v779 = vpop.f32.mrb[0].mxu0
    %v780 = vadd.f32 %v667, %v779
    %v781 = vpop.f32.mrb[0].mxu0
    %v782 = vadd.f32 %v669, %v781
    %v783 = vpop.f32.mrb[0].mxu0
    %v784 = vadd.f32 %v671, %v783
    %v785 = vpop.f32.mrb[0].mxu0
    %v786 = vadd.f32 %v673, %v785
    %787 = vmatprep.mubr.bf16.mxu0 %v237
    %788 = vmatmul.mubr.bf16.gmra.mrb[0].mxu0 %v236
    %v789 = vpop.f32.mrb[0].mxu0
    %v790 = vadd.f32 %v677, %v789
    %v791 = vpop.f32.mrb[0].mxu0
    %v792 = vadd.f32 %v679, %v791
    %v793 = vpop.f32.mrb[0].mxu0
    %v794 = vadd.f32 %v681, %v793
    %v795 = vpop.f32.mrb[0].mxu0
    %v796 = vadd.f32 %v683, %v795
    %797 = vmatprep.mubr.bf16.mxu0 %v241
    %798 = vmatmul.mubr.bf16.gmra.mrb[0].mxu0 %v240
    %v799 = vpop.f32.mrb[0].mxu0
    %v800 = vadd.f32 %v687, %v799
    %v801 = vpop.f32.mrb[0].mxu0
    %v802 = vadd.f32 %v689, %v801
    %v803 = vpop.f32.mrb[0].mxu0
    %v804 = vadd.f32 %v691, %v803
    %v805 = vpop.f32.mrb[0].mxu0
    %v806 = vadd.f32 %v693, %v805
    %807 = vmatprep.mubr.bf16.mxu0 %v245
    %808 = vmatmul.mubr.bf16.gmra.mrb[0].mxu0 %v244
    %v809 = vpop.f32.mrb[0].mxu0
    %v810 = vadd.f32 %v697, %v809
    %v811 = vpop.f32.mrb[0].mxu0
    %v812 = vadd.f32 %v699, %v811
    %v813 = vpop.f32.mrb[0].mxu0
    %v814 = vadd.f32 %v701, %v813
    %v815 = vpop.f32.mrb[0].mxu0
    %v816 = vadd.f32 %v703, %v815
    %817 = vmatprep.mubr.bf16.mxu0 %v249
    %818 = vmatmul.mubr.bf16.gmra.mrb[0].mxu0 %v248
    %v819 = vpop.f32.mrb[0].mxu0
    %v820 = vadd.f32 %v707, %v819
    %v821 = vpop.f32.mrb[0].mxu0
    %v822 = vadd.f32 %v709, %v821
    %v823 = vpop.f32.mrb[0].mxu0
    %v824 = vadd.f32 %v711, %v823
    %v825 = vpop.f32.mrb[0].mxu0
    %v826 = vadd.f32 %v713, %v825
    %827 = vdwg.mxu0
    %828 = vst [vmem:[#allocation5] sm:$0xff] %v750
    %829 = vst [vmem:[#allocation5 + $0x8] sm:$0xff] %v752
    %830 = vst [vmem:[#allocation5 + $0x10] sm:$0xff] %v754
    %831 = vst [vmem:[#allocation5 + $0x18] sm:$0xff] %v756
    %832 = vst [vmem:[#allocation5 + $0x20] sm:$0xff] %v760
    %833 = vst [vmem:[#allocation5 + $0x28] sm:$0xff] %v762
    %834 = vst [vmem:[#allocation5 + $0x30] sm:$0xff] %v764
    %835 = vst [vmem:[#allocation5 + $0x38] sm:$0xff] %v766
    %836 = vst [vmem:[#allocation5 + $0x40] sm:$0xff] %v770
    %837 = vst [vmem:[#allocation5 + $0x48] sm:$0xff] %v772
    %838 = vst [vmem:[#allocation5 + $0x50] sm:$0xff] %v774
    %839 = vst [vmem:[#allocation5 + $0x58] sm:$0xff] %v776
    %840 = vst [vmem:[#allocation5 + $0x60] sm:$0xff] %v780
    %841 = vst [vmem:[#allocation5 + $0x68] sm:$0xff] %v782
    %842 = vst [vmem:[#allocation5 + $0x70] sm:$0xff] %v784
    %843 = vst [vmem:[#allocation5 + $0x78] sm:$0xff] %v786
    %844 = vst [vmem:[#allocation5 + $0x80] sm:$0xff] %v790
    %845 = vst [vmem:[#allocation5 + $0x88] sm:$0xff] %v792
    %846 = vst [vmem:[#allocation5 + $0x90] sm:$0xff] %v794
    %847 = vst [vmem:[#allocation5 + $0x98] sm:$0xff] %v796
    %848 = vst [vmem:[#allocation5 + $0xa0] sm:$0xff] %v800
    %849 = vst [vmem:[#allocation5 + $0xa8] sm:$0xff] %v802
    %850 = vst [vmem:[#allocation5 + $0xb0] sm:$0xff] %v804
    %851 = vst [vmem:[#allocation5 + $0xb8] sm:$0xff] %v806
    %852 = vst [vmem:[#allocation5 + $0xc0] sm:$0xff] %v810
    %853 = vst [vmem:[#allocation5 + $0xc8] sm:$0xff] %v812
    %854 = vst [vmem:[#allocation5 + $0xd0] sm:$0xff] %v814
    %855 = vst [vmem:[#allocation5 + $0xd8] sm:$0xff] %v816
    %856 = vst [vmem:[#allocation5 + $0xe0] sm:$0xff] %v820
    %857 = vst [vmem:[#allocation5 + $0xe8] sm:$0xff] %v822
    %858 = vst [vmem:[#allocation5 + $0xf0] sm:$0xff] %v824
    %859 = vst [vmem:[#allocation5 + $0xf8] sm:$0xff] %v826
    // Predicated region
    $region14: #{triclops_forward.3} parent=1 // pred_check
      _
    $region15: #{triclops_forward.3} parent=1 // pred_check_branch
      %861 = sbr.rel (0) target = $region17
    $region16: #{triclops_forward.3} parent=1 // pred_region
      %s863 = ssub.s32 4096, 4096
      %864 = vsyncadd [#allocation4], %s863
      %s865 = sshll.u32 [#allocation5], 4
      %s866 = int_to_ptr.vmem [resolvable:$true] %s865
      %871 = dma.vmem_to_hbm [thread:$0]  %s866, 4096, %s2, [#allocation4], 256, 256, 16
    $region17: #{triclops_forward.3} parent=1 // pred_fallthru
      _
    // Predicated region
    $region18: #{triclops_forward.3} parent=1 // pred_check
      _
    $region19: #{triclops_forward.3} parent=1 // pred_check_branch
      %873 = sbr.rel (0) target = $region21
    $region20: #{triclops_forward.3} parent=1 // pred_region
      %874 = dma.done [#allocation4], 4096
    $region21: #{triclops_forward.3} parent=1 // pred_fallthru
      _
    %875 = vsyncpa [#allocation3], 1
    %876 = vsyncpa [#allocation4], 1

// kernel: triclops_forward.2
$region0: #{triclops_forward.2}
  #allocation0 [shape = 'u32[]', space=smem, size = 0x4, offset = 0x4, fixed_abs, tag = 'smem constant byte address 0x4 - core index']
  #allocation1 [shape = 'u32[144,128]{1,0:T(1,128)}', space=vmem, size = 0x12000, scoped, tag = 'internal scratch']
  %s0 = inlined_call_operand.vmem [shape: bf16[128,256], index: 0, kind: input, shape index: {}]
  %s1 = inlined_call_operand.hbm [shape: bf16[256,512], index: 1, kind: input, shape index: {}]
  %s2 = inlined_call_operand.vmem [shape: bf16[128,512], index: 2, kind: output, shape index: {}]
  %s3 = sld [smem:[#allocation0]]
  $region22: #{triclops_forward.2} parent=0
    _
  %s5 = ssub.s32 1, %s3
  %s6 = scalar_select 0, %s5, %s3
  $region1: #{triclops_forward.2} parent=0
    #allocation2 [shape = 'u8[262144]{0}', space=vmem, size = 0x40000, scoped, tag = 'input window, operand 1, single buffered']
    #allocation3 [shape = 's32[1]{0}', space=sflag, size = 0x4, scoped, tag = 'scoped memory for triclops_forward.2']
    %7 = vsyncpa [#allocation3], 0
    // Predicated region
    $region2: #{triclops_forward.2} parent=1 // pred_check
      _
    $region3: #{triclops_forward.2} parent=1 // pred_check_branch
      %9 = sbr.rel (0) target = $region5
    $region4: #{triclops_forward.2} parent=1 // pred_region
      _
    $region5: #{triclops_forward.2} parent=1 // pred_fallthru
      _
    // Predicated region
    $region6: #{triclops_forward.2} parent=1 // pred_check
      _
    $region7: #{triclops_forward.2} parent=1 // pred_check_branch
      %11 = sbr.rel (0) target = $region9
    $region8: #{triclops_forward.2} parent=1 // pred_region
      %s13 = ssub.s32 8192, 8192
      %14 = vsyncadd [#allocation3], %s13
      %s15 = sshll.u32 [#allocation2], 4
      %s16 = int_to_ptr.vmem [resolvable:$true] %s15
      %21 = dma.hbm_to_vmem [thread:$0]  %s1, 8192, %s16, [#allocation3], 256, 256, 16
    $region9: #{triclops_forward.2} parent=1 // pred_fallthru
      _
    // Predicated region
    $region10: #{triclops_forward.2} parent=1 // pred_check
      _
    $region11: #{triclops_forward.2} parent=1 // pred_check_branch
      %23 = sbr.rel (0) target = $region13
    $region12: #{triclops_forward.2} parent=1 // pred_region
      %24 = dma.done [#allocation3], 8192
    $region13: #{triclops_forward.2} parent=1 // pred_fallthru
      _
    %v25 = vld [vmem:[%s0] sm:$0xff]
    %v26 = vld [vmem:[%s0 + $0x8] sm:$0xff]
    %v27 = vld [vmem:[%s0 + $0x10] sm:$0xff]
    %v28 = vld [vmem:[%s0 + $0x18] sm:$0xff]
    %v29 = vld [vmem:[%s0 + $0x20] sm:$0xff]
    %v30 = vld [vmem:[%s0 + $0x28] sm:$0xff]
    %v31 = vld [vmem:[%s0 + $0x30] sm:$0xff]
    %v32 = vld [vmem:[%s0 + $0x38] sm:$0xff]
    %v33 = vld [vmem:[%s0 + $0x40] sm:$0xff]
    %v34 = vld [vmem:[%s0 + $0x48] sm:$0xff]
    %v35 = vld [vmem:[%s0 + $0x50] sm:$0xff]
    %v36 = vld [vmem:[%s0 + $0x58] sm:$0xff]
    %v37 = vld [vmem:[%s0 + $0x60] sm:$0xff]
    %v38 = vld [vmem:[%s0 + $0x68] sm:$0xff]
    %v39 = vld [vmem:[%s0 + $0x70] sm:$0xff]
    %v40 = vld [vmem:[%s0 + $0x78] sm:$0xff]
    %v41 = vld [vmem:[#allocation2] sm:$0xff]
    %v42 = vld [vmem:[#allocation2 + $0x8] sm:$0xff]
    %v43 = vld [vmem:[#allocation2 + $0x10] sm:$0xff]
    %v44 = vld [vmem:[#allocation2 + $0x18] sm:$0xff]
    %v45 = vld [vmem:[#allocation2 + $0x20] sm:$0xff]
    %v46 = vld [vmem:[#allocation2 + $0x28] sm:$0xff]
    %v47 = vld [vmem:[#allocation2 + $0x30] sm:$0xff]
    %v48 = vld [vmem:[#allocation2 + $0x38] sm:$0xff]
    %v49 = vld [vmem:[#allocation2 + $0x40] sm:$0xff]
    %v50 = vld [vmem:[#allocation2 + $0x48] sm:$0xff]
    %v51 = vld [vmem:[#allocation2 + $0x50] sm:$0xff]
    %v52 = vld [vmem:[#allocation2 + $0x58] sm:$0xff]
    %v53 = vld [vmem:[#allocation2 + $0x60] sm:$0xff]
    %v54 = vld [vmem:[#allocation2 + $0x68] sm:$0xff]
    %v55 = vld [vmem:[#allocation2 + $0x70] sm:$0xff]
    %v56 = vld [vmem:[#allocation2 + $0x78] sm:$0xff]
    %v57 = vld [vmem:[#allocation2 + $0x80] sm:$0xff]
    %v58 = vld [vmem:[#allocation2 + $0x88] sm:$0xff]
    %v59 = vld [vmem:[#allocation2 + $0x90] sm:$0xff]
    %v60 = vld [vmem:[#allocation2 + $0x98] sm:$0xff]
    %v61 = vld [vmem:[#allocation2 + $0xa0] sm:$0xff]
    %v62 = vld [vmem:[#allocation2 + $0xa8] sm:$0xff]
    %v63 = vld [vmem:[#allocation2 + $0xb0] sm:$0xff]
    %v64 = vld [vmem:[#allocation2 + $0xb8] sm:$0xff]
    %v65 = vld [vmem:[#allocation2 + $0xc0] sm:$0xff]
    %v66 = vld [vmem:[#allocation2 + $0xc8] sm:$0xff]
    %v67 = vld [vmem:[#allocation2 + $0xd0] sm:$0xff]
    %v68 = vld [vmem:[#allocation2 + $0xd8] sm:$0xff]
    %v69 = vld [vmem:[#allocation2 + $0xe0] sm:$0xff]
    %v70 = vld [vmem:[#allocation2 + $0xe8] sm:$0xff]
    %v71 = vld [vmem:[#allocation2 + $0xf0] sm:$0xff]
    %v72 = vld [vmem:[#allocation2 + $0xf8] sm:$0xff]
    %v73 = vld [vmem:[#allocation2 + $0x100] sm:$0xff]
    %v74 = vld [vmem:[#allocation2 + $0x108] sm:$0xff]
    %v75 = vld [vmem:[#allocation2 + $0x110] sm:$0xff]
    %v76 = vld [vmem:[#allocation2 + $0x118] sm:$0xff]
    %v77 = vld [vmem:[#allocation2 + $0x120] sm:$0xff]
    %v78 = vld [vmem:[#allocation2 + $0x128] sm:$0xff]
    %v79 = vld [vmem:[#allocation2 + $0x130] sm:$0xff]
    %v80 = vld [vmem:[#allocation2 + $0x138] sm:$0xff]
    %v81 = vld [vmem:[#allocation2 + $0x140] sm:$0xff]
    %v82 = vld [vmem:[#allocation2 + $0x148] sm:$0xff]
    %v83 = vld [vmem:[#allocation2 + $0x150] sm:$0xff]
    %v84 = vld [vmem:[#allocation2 + $0x158] sm:$0xff]
    %v85 = vld [vmem:[#allocation2 + $0x160] sm:$0xff]
    %v86 = vld [vmem:[#allocation2 + $0x168] sm:$0xff]
    %v87 = vld [vmem:[#allocation2 + $0x170] sm:$0xff]
    %v88 = vld [vmem:[#allocation2 + $0x178] sm:$0xff]
    %v89 = vld [vmem:[#allocation2 + $0x180] sm:$0xff]
    %v90 = vld [vmem:[#allocation2 + $0x188] sm:$0xff]
    %v91 = vld [vmem:[#allocation2 + $0x190] sm:$0xff]
    %v92 = vld [vmem:[#allocation2 + $0x198] sm:$0xff]
    %v93 = vld [vmem:[#allocation2 + $0x1a0] sm:$0xff]
    %v94 = vld [vmem:[#allocation2 + $0x1a8] sm:$0xff]
    %v95 = vld [vmem:[#allocation2 + $0x1b0] sm:$0xff]
    %v96 = vld [vmem:[#allocation2 + $0x1b8] sm:$0xff]
    %v97 = vld [vmem:[#allocation2 + $0x1c0] sm:$0xff]
    %v98 = vld [vmem:[#allocation2 + $0x1c8] sm:$0xff]
    %v99 = vld [vmem:[#allocation2 + $0x1d0] sm:$0xff]
    %v100 = vld [vmem:[#allocation2 + $0x1d8] sm:$0xff]
    %v101 = vld [vmem:[#allocation2 + $0x1e0] sm:$0xff]
    %v102 = vld [vmem:[#allocation2 + $0x1e8] sm:$0xff]
    %v103 = vld [vmem:[#allocation2 + $0x1f0] sm:$0xff]
    %v104 = vld [vmem:[#allocation2 + $0x1f8] sm:$0xff]
    %v121 = vunpack.c.l.b16 %v25
    %v122 = vunpack.c.h.b16 %v25
    %v123 = vunpack.c.l.b16 %v26
    %v124 = vunpack.c.h.b16 %v26
    %v125 = vunpack.c.l.b16 %v27
    %v126 = vunpack.c.h.b16 %v27
    %v127 = vunpack.c.l.b16 %v28
    %v128 = vunpack.c.h.b16 %v28
    %v129 = vunpack.c.l.b16 %v29
    %v130 = vunpack.c.h.b16 %v29
    %v131 = vunpack.c.l.b16 %v30
    %v132 = vunpack.c.h.b16 %v30
    %v133 = vunpack.c.l.b16 %v31
    %v134 = vunpack.c.h.b16 %v31
    %v135 = vunpack.c.l.b16 %v32
    %v136 = vunpack.c.h.b16 %v32
    %v137 = vunpack.c.l.b16 %v33
    %v138 = vunpack.c.h.b16 %v33
    %v139 = vunpack.c.l.b16 %v34
    %v140 = vunpack.c.h.b16 %v34
    %v141 = vunpack.c.l.b16 %v35
    %v142 = vunpack.c.h.b16 %v35
    %v143 = vunpack.c.l.b16 %v36
    %v144 = vunpack.c.h.b16 %v36
    %v145 = vunpack.c.l.b16 %v37
    %v146 = vunpack.c.h.b16 %v37
    %v147 = vunpack.c.l.b16 %v38
    %v148 = vunpack.c.h.b16 %v38
    %v149 = vunpack.c.l.b16 %v39
    %v150 = vunpack.c.h.b16 %v39
    %v151 = vunpack.c.l.b16 %v40
    %v152 = vunpack.c.h.b16 %v40
    %v153 = vpack.c.b16 %v123, %v121
    %v154 = vpack.c.b16 %v124, %v122
    %v155 = vpack.c.b16 %v127, %v125
    %v156 = vpack.c.b16 %v128, %v126
    %v157 = vpack.c.b16 %v131, %v129
    %v158 = vpack.c.b16 %v132, %v130
    %v159 = vpack.c.b16 %v135, %v133
    %v160 = vpack.c.b16 %v136, %v134
    %v161 = vpack.c.b16 %v139, %v137
    %v162 = vpack.c.b16 %v140, %v138
    %v163 = vpack.c.b16 %v143, %v141
    %v164 = vpack.c.b16 %v144, %v142
    %v165 = vpack.c.b16 %v147, %v145
    %v166 = vpack.c.b16 %v148, %v146
    %v167 = vpack.c.b16 %v151, %v149
    %v168 = vpack.c.b16 %v152, %v150
    %v249 = vunpack.c.l.b16 %v41
    %v250 = vunpack.c.h.b16 %v41
    %v251 = vunpack.c.l.b16 %v42
    %v252 = vunpack.c.h.b16 %v42
    %v253 = vunpack.c.l.b16 %v43
    %v254 = vunpack.c.h.b16 %v43
    %v255 = vunpack.c.l.b16 %v44
    %v256 = vunpack.c.h.b16 %v44
    %v257 = vunpack.c.l.b16 %v45
    %v258 = vunpack.c.h.b16 %v45
    %v259 = vunpack.c.l.b16 %v46
    %v260 = vunpack.c.h.b16 %v46
    %v261 = vunpack.c.l.b16 %v47
    %v262 = vunpack.c.h.b16 %v47
    %v263 = vunpack.c.l.b16 %v48
    %v264 = vunpack.c.h.b16 %v48
    %v265 = vunpack.c.l.b16 %v49
    %v266 = vunpack.c.h.b16 %v49
    %v267 = vunpack.c.l.b16 %v50
    %v268 = vunpack.c.h.b16 %v50
    %v269 = vunpack.c.l.b16 %v51
    %v270 = vunpack.c.h.b16 %v51
    %v271 = vunpack.c.l.b16 %v52
    %v272 = vunpack.c.h.b16 %v52
    %v273 = vunpack.c.l.b16 %v53
    %v274 = vunpack.c.h.b16 %v53
    %v275 = vunpack.c.l.b16 %v54
    %v276 = vunpack.c.h.b16 %v54
    %v277 = vunpack.c.l.b16 %v55
    %v278 = vunpack.c.h.b16 %v55
    %v279 = vunpack.c.l.b16 %v56
    %v280 = vunpack.c.h.b16 %v56
    %v281 = vunpack.c.l.b16 %v57
    %v282 = vunpack.c.h.b16 %v57
    %v283 = vunpack.c.l.b16 %v58
    %v284 = vunpack.c.h.b16 %v58
    %v285 = vunpack.c.l.b16 %v59
    %v286 = vunpack.c.h.b16 %v59
    %v287 = vunpack.c.l.b16 %v60
    %v288 = vunpack.c.h.b16 %v60
    %v289 = vunpack.c.l.b16 %v61
    %v290 = vunpack.c.h.b16 %v61
    %v291 = vunpack.c.l.b16 %v62
    %v292 = vunpack.c.h.b16 %v62
    %v293 = vunpack.c.l.b16 %v63
    %v294 = vunpack.c.h.b16 %v63
    %v295 = vunpack.c.l.b16 %v64
    %v296 = vunpack.c.h.b16 %v64
    %v297 = vunpack.c.l.b16 %v65
    %v298 = vunpack.c.h.b16 %v65
    %v299 = vunpack.c.l.b16 %v66
    %v300 = vunpack.c.h.b16 %v66
    %v301 = vunpack.c.l.b16 %v67
    %v302 = vunpack.c.h.b16 %v67
    %v303 = vunpack.c.l.b16 %v68
    %v304 = vunpack.c.h.b16 %v68
    %v305 = vunpack.c.l.b16 %v69
    %v306 = vunpack.c.h.b16 %v69
    %v307 = vunpack.c.l.b16 %v70
    %v308 = vunpack.c.h.b16 %v70
    %v309 = vunpack.c.l.b16 %v71
    %v310 = vunpack.c.h.b16 %v71
    %v311 = vunpack.c.l.b16 %v72
    %v312 = vunpack.c.h.b16 %v72
    %v313 = vunpack.c.l.b16 %v73
    %v314 = vunpack.c.h.b16 %v73
    %v315 = vunpack.c.l.b16 %v74
    %v316 = vunpack.c.h.b16 %v74
    %v317 = vunpack.c.l.b16 %v75
    %v318 = vunpack.c.h.b16 %v75
    %v319 = vunpack.c.l.b16 %v76
    %v320 = vunpack.c.h.b16 %v76
    %v321 = vunpack.c.l.b16 %v77
    %v322 = vunpack.c.h.b16 %v77
    %v323 = vunpack.c.l.b16 %v78
    %v324 = vunpack.c.h.b16 %v78
    %v325 = vunpack.c.l.b16 %v79
    %v326 = vunpack.c.h.b16 %v79
    %v327 = vunpack.c.l.b16 %v80
    %v328 = vunpack.c.h.b16 %v80
    %v329 = vunpack.c.l.b16 %v81
    %v330 = vunpack.c.h.b16 %v81
    %v331 = vunpack.c.l.b16 %v82
    %v332 = vunpack.c.h.b16 %v82
    %v333 = vunpack.c.l.b16 %v83
    %v334 = vunpack.c.h.b16 %v83
    %v335 = vunpack.c.l.b16 %v84
    %v336 = vunpack.c.h.b16 %v84
    %v337 = vunpack.c.l.b16 %v85
    %v338 = vunpack.c.h.b16 %v85
    %v339 = vunpack.c.l.b16 %v86
    %v340 = vunpack.c.h.b16 %v86
    %v341 = vunpack.c.l.b16 %v87
    %v342 = vunpack.c.h.b16 %v87
    %v343 = vunpack.c.l.b16 %v88
    %v344 = vunpack.c.h.b16 %v88
    %v345 = vunpack.c.l.b16 %v89
    %v346 = vunpack.c.h.b16 %v89
    %v347 = vunpack.c.l.b16 %v90
    %v348 = vunpack.c.h.b16 %v90
    %v349 = vunpack.c.l.b16 %v91
    %v350 = vunpack.c.h.b16 %v91
    %v351 = vunpack.c.l.b16 %v92
    %v352 = vunpack.c.h.b16 %v92
    %v353 = vunpack.c.l.b16 %v93
    %v354 = vunpack.c.h.b16 %v93
    %v355 = vunpack.c.l.b16 %v94
    %v356 = vunpack.c.h.b16 %v94
    %v357 = vunpack.c.l.b16 %v95
    %v358 = vunpack.c.h.b16 %v95
    %v359 = vunpack.c.l.b16 %v96
    %v360 = vunpack.c.h.b16 %v96
    %v361 = vunpack.c.l.b16 %v97
    %v362 = vunpack.c.h.b16 %v97
    %v363 = vunpack.c.l.b16 %v98
    %v364 = vunpack.c.h.b16 %v98
    %v365 = vunpack.c.l.b16 %v99
    %v366 = vunpack.c.h.b16 %v99
    %v367 = vunpack.c.l.b16 %v100
    %v368 = vunpack.c.h.b16 %v100
    %v369 = vunpack.c.l.b16 %v101
    %v370 = vunpack.c.h.b16 %v101
    %v371 = vunpack.c.l.b16 %v102
    %v372 = vunpack.c.h.b16 %v102
    %v373 = vunpack.c.l.b16 %v103
    %v374 = vunpack.c.h.b16 %v103
    %v375 = vunpack.c.l.b16 %v104
    %v376 = vunpack.c.h.b16 %v104
    %v377 = vpack.c.b16 %v253, %v249
    %v378 = vpack.c.b16 %v254, %v250
    %v379 = vpack.c.b16 %v255, %v251
    %v380 = vpack.c.b16 %v256, %v252
    %v381 = vpack.c.b16 %v261, %v257
    %v382 = vpack.c.b16 %v262, %v258
    %v383 = vpack.c.b16 %v263, %v259
    %v384 = vpack.c.b16 %v264, %v260
    %v385 = vpack.c.b16 %v269, %v265
    %v386 = vpack.c.b16 %v270, %v266
    %v387 = vpack.c.b16 %v271, %v267
    %v388 = vpack.c.b16 %v272, %v268
    %v389 = vpack.c.b16 %v277, %v273
    %v390 = vpack.c.b16 %v278, %v274
    %v391 = vpack.c.b16 %v279, %v275
    %v392 = vpack.c.b16 %v280, %v276
    %v393 = vpack.c.b16 %v285, %v281
    %v394 = vpack.c.b16 %v286, %v282
    %v395 = vpack.c.b16 %v287, %v283
    %v396 = vpack.c.b16 %v288, %v284
    %v397 = vpack.c.b16 %v293, %v289
    %v398 = vpack.c.b16 %v294, %v290
    %v399 = vpack.c.b16 %v295, %v291
    %v400 = vpack.c.b16 %v296, %v292
    %v401 = vpack.c.b16 %v301, %v297
    %v402 = vpack.c.b16 %v302, %v298
    %v403 = vpack.c.b16 %v303, %v299
    %v404 = vpack.c.b16 %v304, %v300
    %v405 = vpack.c.b16 %v309, %v305
    %v406 = vpack.c.b16 %v310, %v306
    %v407 = vpack.c.b16 %v311, %v307
    %v408 = vpack.c.b16 %v312, %v308
    %v409 = vpack.c.b16 %v317, %v313
    %v410 = vpack.c.b16 %v318, %v314
    %v411 = vpack.c.b16 %v319, %v315
    %v412 = vpack.c.b16 %v320, %v316
    %v413 = vpack.c.b16 %v325, %v321
    %v414 = vpack.c.b16 %v326, %v322
    %v415 = vpack.c.b16 %v327, %v323
    %v416 = vpack.c.b16 %v328, %v324
    %v417 = vpack.c.b16 %v333, %v329
    %v418 = vpack.c.b16 %v334, %v330
    %v419 = vpack.c.b16 %v335, %v331
    %v420 = vpack.c.b16 %v336, %v332
    %v421 = vpack.c.b16 %v341, %v337
    %v422 = vpack.c.b16 %v342, %v338
    %v423 = vpack.c.b16 %v343, %v339
    %v424 = vpack.c.b16 %v344, %v340
    %v425 = vpack.c.b16 %v349, %v345
    %v426 = vpack.c.b16 %v350, %v346
    %v427 = vpack.c.b16 %v351, %v347
    %v428 = vpack.c.b16 %v352, %v348
    %v429 = vpack.c.b16 %v357, %v353
    %v430 = vpack.c.b16 %v358, %v354
    %v431 = vpack.c.b16 %v359, %v355
    %v432 = vpack.c.b16 %v360, %v356
    %v433 = vpack.c.b16 %v365, %v361
    %v434 = vpack.c.b16 %v366, %v362
    %v435 = vpack.c.b16 %v367, %v363
    %v436 = vpack.c.b16 %v368, %v364
    %v437 = vpack.c.b16 %v373, %v369
    %v438 = vpack.c.b16 %v374, %v370
    %v439 = vpack.c.b16 %v375, %v371
    %v440 = vpack.c.b16 %v376, %v372
    %505 = vmatprep.subr.bf16.mxu0 %v378
    %506 = vmatpush1.bf16.msra.mxu0 %v377
    %507 = vmatprep.subr.bf16.mxu0 %v382
    %508 = vmatpush1.bf16.msra.mxu0 %v381
    %509 = vmatprep.subr.bf16.mxu0 %v386
    %510 = vmatpush1.bf16.msra.mxu0 %v385
    %511 = vmatprep.subr.bf16.mxu0 %v390
    %512 = vmatpush1.bf16.msra.mxu0 %v389
    %513 = vmatprep.subr.bf16.mxu0 %v394
    %514 = vmatpush1.bf16.msra.mxu0 %v393
    %515 = vmatprep.subr.bf16.mxu0 %v398
    %516 = vmatpush1.bf16.msra.mxu0 %v397
    %517 = vmatprep.subr.bf16.mxu0 %v402
    %518 = vmatpush1.bf16.msra.mxu0 %v401
    %519 = vmatprep.subr.bf16.mxu0 %v406
    %520 = vmatpush1.bf16.msra.mxu0 %v405
    %521 = vmatprep.subr.bf16.mxu0 %v410
    %522 = vmatpush1.bf16.msra.mxu0 %v409
    %523 = vmatprep.subr.bf16.mxu0 %v414
    %524 = vmatpush1.bf16.msra.mxu0 %v413
    %525 = vmatprep.subr.bf16.mxu0 %v418
    %526 = vmatpush1.bf16.msra.mxu0 %v417
    %527 = vmatprep.subr.bf16.mxu0 %v422
    %528 = vmatpush1.bf16.msra.mxu0 %v421
    %529 = vmatprep.subr.bf16.mxu0 %v426
    %530 = vmatpush1.bf16.msra.mxu0 %v425
    %531 = vmatprep.subr.bf16.mxu0 %v430
    %532 = vmatpush1.bf16.msra.mxu0 %v429
    %533 = vmatprep.subr.bf16.mxu0 %v434
    %534 = vmatpush1.bf16.msra.mxu0 %v433
    %535 = vmatprep.subr.bf16.mxu0 %v438
    %536 = vmatpush1.bf16.msra.mxu0 %v437
    %537 = vmatprep.mubr.bf16.mxu0 %v154
    %538 = vmatmul.mubr.bf16.gmra.mrb[0].mxu0 %v153
    %v539 = vpop.f32.mrb[0].mxu0
    %v540 = vadd.f32 0.0, %v539
    %v541 = vpop.f32.mrb[0].mxu0
    %v542 = vadd.f32 0.0, %v541
    %v543 = vpop.f32.mrb[0].mxu0
    %v544 = vadd.f32 0.0, %v543
    %v545 = vpop.f32.mrb[0].mxu0
    %v546 = vadd.f32 0.0, %v545
    %547 = vmatprep.mubr.bf16.mxu0 %v156
    %548 = vmatmul.mubr.bf16.gmra.mrb[0].mxu0 %v155
    %v549 = vpop.f32.mrb[0].mxu0
    %v550 = vadd.f32 0.0, %v549
    %v551 = vpop.f32.mrb[0].mxu0
    %v552 = vadd.f32 0.0, %v551
    %v553 = vpop.f32.mrb[0].mxu0
    %v554 = vadd.f32 0.0, %v553
    %v555 = vpop.f32.mrb[0].mxu0
    %v556 = vadd.f32 0.0, %v555
    %557 = vmatprep.mubr.bf16.mxu0 %v158
    %558 = vmatmul.mubr.bf16.gmra.mrb[0].mxu0 %v157
    %v559 = vpop.f32.mrb[0].mxu0
    %v560 = vadd.f32 0.0, %v559
    %v561 = vpop.f32.mrb[0].mxu0
    %v562 = vadd.f32 0.0, %v561
    %v563 = vpop.f32.mrb[0].mxu0
    %v564 = vadd.f32 0.0, %v563
    %v565 = vpop.f32.mrb[0].mxu0
    %v566 = vadd.f32 0.0, %v565
    %567 = vmatprep.mubr.bf16.mxu0 %v160
    %568 = vmatmul.mubr.bf16.gmra.mrb[0].mxu0 %v159
    %v569 = vpop.f32.mrb[0].mxu0
    %v570 = vadd.f32 0.0, %v569
    %v571 = vpop.f32.mrb[0].mxu0
    %v572 = vadd.f32 0.0, %v571
    %v573 = vpop.f32.mrb[0].mxu0
    %v574 = vadd.f32 0.0, %v573
    %v575 = vpop.f32.mrb[0].mxu0
    %v576 = vadd.f32 0.0, %v575
    %577 = vmatprep.mubr.bf16.mxu0 %v162
    %578 = vmatmul.mubr.bf16.gmra.mrb[0].mxu0 %v161
    %v579 = vpop.f32.mrb[0].mxu0
    %v580 = vadd.f32 0.0, %v579
    %v581 = vpop.f32.mrb[0].mxu0
    %v582 = vadd.f32 0.0, %v581
    %v583 = vpop.f32.mrb[0].mxu0
    %v584 = vadd.f32 0.0, %v583
    %v585 = vpop.f32.mrb[0].mxu0
    %v586 = vadd.f32 0.0, %v585
    %587 = vmatprep.mubr.bf16.mxu0 %v164
    %588 = vmatmul.mubr.bf16.gmra.mrb[0].mxu0 %v163
    %v589 = vpop.f32.mrb[0].mxu0
    %v590 = vadd.f32 0.0, %v589
    %v591 = vpop.f32.mrb[0].mxu0
    %v592 = vadd.f32 0.0, %v591
    %v593 = vpop.f32.mrb[0].mxu0
    %v594 = vadd.f32 0.0, %v593
    %v595 = vpop.f32.mrb[0].mxu0
    %v596 = vadd.f32 0.0, %v595
    %597 = vmatprep.mubr.bf16.mxu0 %v166
    %598 = vmatmul.mubr.bf16.gmra.mrb[0].mxu0 %v165
    %v599 = vpop.f32.mrb[0].mxu0
    %v600 = vadd.f32 0.0, %v599
    %v601 = vpop.f32.mrb[0].mxu0
    %v602 = vadd.f32 0.0, %v601
    %v603 = vpop.f32.mrb[0].mxu0
    %v604 = vadd.f32 0.0, %v603
    %v605 = vpop.f32.mrb[0].mxu0
    %v606 = vadd.f32 0.0, %v605
    %607 = vmatprep.mubr.bf16.mxu0 %v168
    %608 = vmatmul.mubr.bf16.gmra.mrb[0].mxu0 %v167
    %v609 = vpop.f32.mrb[0].mxu0
    %v610 = vadd.f32 0.0, %v609
    %v611 = vpop.f32.mrb[0].mxu0
    %v612 = vadd.f32 0.0, %v611
    %v613 = vpop.f32.mrb[0].mxu0
    %v614 = vadd.f32 0.0, %v613
    %v615 = vpop.f32.mrb[0].mxu0
    %v616 = vadd.f32 0.0, %v615
    %617 = vdwg.mxu0
    %618 = vmatprep.subr.bf16.mxu0 %v380
    %619 = vmatpush1.bf16.msra.mxu0 %v379
    %620 = vmatprep.subr.bf16.mxu0 %v384
    %621 = vmatpush1.bf16.msra.mxu0 %v383
    %622 = vmatprep.subr.bf16.mxu0 %v388
    %623 = vmatpush1.bf16.msra.mxu0 %v387
    %624 = vmatprep.subr.bf16.mxu0 %v392
    %625 = vmatpush1.bf16.msra.mxu0 %v391
    %626 = vmatprep.subr.bf16.mxu0 %v396
    %627 = vmatpush1.bf16.msra.mxu0 %v395
    %628 = vmatprep.subr.bf16.mxu0 %v400
    %629 = vmatpush1.bf16.msra.mxu0 %v399
    %630 = vmatprep.subr.bf16.mxu0 %v404
    %631 = vmatpush1.bf16.msra.mxu0 %v403
    %632 = vmatprep.subr.bf16.mxu0 %v408
    %633 = vmatpush1.bf16.msra.mxu0 %v407
    %634 = vmatprep.subr.bf16.mxu0 %v412
    %635 = vmatpush1.bf16.msra.mxu0 %v411
    %636 = vmatprep.subr.bf16.mxu0 %v416
    %637 = vmatpush1.bf16.msra.mxu0 %v415
    %638 = vmatprep.subr.bf16.mxu0 %v420
    %639 = vmatpush1.bf16.msra.mxu0 %v419
    %640 = vmatprep.subr.bf16.mxu0 %v424
    %641 = vmatpush1.bf16.msra.mxu0 %v423
    %642 = vmatprep.subr.bf16.mxu0 %v428
    %643 = vmatpush1.bf16.msra.mxu0 %v427
    %644 = vmatprep.subr.bf16.mxu0 %v432
    %645 = vmatpush1.bf16.msra.mxu0 %v431
    %646 = vmatprep.subr.bf16.mxu0 %v436
    %647 = vmatpush1.bf16.msra.mxu0 %v435
    %648 = vmatprep.subr.bf16.mxu0 %v440
    %649 = vmatpush1.bf16.msra.mxu0 %v439
    %650 = vmatprep.mubr.bf16.mxu0 %v154
    %651 = vmatmul.mubr.bf16.gmra.mrb[0].mxu0 %v153
    %v652 = vpop.f32.mrb[0].mxu0
    %v653 = vadd.f32 0.0, %v652
    %v654 = vpop.f32.mrb[0].mxu0
    %v655 = vadd.f32 0.0, %v654
    %v656 = vpop.f32.mrb[0].mxu0
    %v657 = vadd.f32 0.0, %v656
    %v658 = vpop.f32.mrb[0].mxu0
    %v659 = vadd.f32 0.0, %v658
    %660 = vmatprep.mubr.bf16.mxu0 %v156
    %661 = vmatmul.mubr.bf16.gmra.mrb[0].mxu0 %v155
    %v662 = vpop.f32.mrb[0].mxu0
    %v663 = vadd.f32 0.0, %v662
    %v664 = vpop.f32.mrb[0].mxu0
    %v665 = vadd.f32 0.0, %v664
    %v666 = vpop.f32.mrb[0].mxu0
    %v667 = vadd.f32 0.0, %v666
    %v668 = vpop.f32.mrb[0].mxu0
    %v669 = vadd.f32 0.0, %v668
    %670 = vmatprep.mubr.bf16.mxu0 %v158
    %671 = vmatmul.mubr.bf16.gmra.mrb[0].mxu0 %v157
    %v672 = vpop.f32.mrb[0].mxu0
    %v673 = vadd.f32 0.0, %v672
    %v674 = vpop.f32.mrb[0].mxu0
    %v675 = vadd.f32 0.0, %v674
    %v676 = vpop.f32.mrb[0].mxu0
    %v677 = vadd.f32 0.0, %v676
    %v678 = vpop.f32.mrb[0].mxu0
    %v679 = vadd.f32 0.0, %v678
    %680 = vmatprep.mubr.bf16.mxu0 %v160
    %681 = vmatmul.mubr.bf16.gmra.mrb[0].mxu0 %v159
    %v682 = vpop.f32.mrb[0].mxu0
    %v683 = vadd.f32 0.0, %v682
    %v684 = vpop.f32.mrb[0].mxu0
    %v685 = vadd.f32 0.0, %v684
    %v686 = vpop.f32.mrb[0].mxu0
    %v687 = vadd.f32 0.0, %v686
    %v688 = vpop.f32.mrb[0].mxu0
    %v689 = vadd.f32 0.0, %v688
    %690 = vmatprep.mubr.bf16.mxu0 %v162
    %691 = vmatmul.mubr.bf16.gmra.mrb[0].mxu0 %v161
    %v692 = vpop.f32.mrb[0].mxu0
    %v693 = vadd.f32 0.0, %v692
    %v694 = vpop.f32.mrb[0].mxu0
    %v695 = vadd.f32 0.0, %v694
    %v696 = vpop.f32.mrb[0].mxu0
    %v697 = vadd.f32 0.0, %v696
    %v698 = vpop.f32.mrb[0].mxu0
    %v699 = vadd.f32 0.0, %v698
    %700 = vmatprep.mubr.bf16.mxu0 %v164
    %701 = vmatmul.mubr.bf16.gmra.mrb[0].mxu0 %v163
    %v702 = vpop.f32.mrb[0].mxu0
    %v703 = vadd.f32 0.0, %v702
    %v704 = vpop.f32.mrb[0].mxu0
    %v705 = vadd.f32 0.0, %v704
    %v706 = vpop.f32.mrb[0].mxu0
    %v707 = vadd.f32 0.0, %v706
    %v708 = vpop.f32.mrb[0].mxu0
    %v709 = vadd.f32 0.0, %v708
    %710 = vmatprep.mubr.bf16.mxu0 %v166
    %711 = vmatmul.mubr.bf16.gmra.mrb[0].mxu0 %v165
    %v712 = vpop.f32.mrb[0].mxu0
    %v713 = vadd.f32 0.0, %v712
    %v714 = vpop.f32.mrb[0].mxu0
    %v715 = vadd.f32 0.0, %v714
    %v716 = vpop.f32.mrb[0].mxu0
    %v717 = vadd.f32 0.0, %v716
    %v718 = vpop.f32.mrb[0].mxu0
    %v719 = vadd.f32 0.0, %v718
    %720 = vmatprep.mubr.bf16.mxu0 %v168
    %721 = vmatmul.mubr.bf16.gmra.mrb[0].mxu0 %v167
    %v722 = vpop.f32.mrb[0].mxu0
    %v723 = vadd.f32 0.0, %v722
    %v724 = vpop.f32.mrb[0].mxu0
    %v725 = vadd.f32 0.0, %v724
    %v726 = vpop.f32.mrb[0].mxu0
    %v727 = vadd.f32 0.0, %v726
    %v728 = vpop.f32.mrb[0].mxu0
    %v729 = vadd.f32 0.0, %v728
    %730 = vdwg.mxu0
    %v731 = vmax.f32 %v540, 0.0
    %v732 = vmax.f32 %v542, 0.0
    %v733 = vmax.f32 %v653, 0.0
    %v734 = vmax.f32 %v655, 0.0
    %v735 = vmax.f32 %v544, 0.0
    %v736 = vmax.f32 %v546, 0.0
    %v737 = vmax.f32 %v657, 0.0
    %v738 = vmax.f32 %v659, 0.0
    %v739 = vmax.f32 %v550, 0.0
    %v740 = vmax.f32 %v552, 0.0
    %v741 = vmax.f32 %v663, 0.0
    %v742 = vmax.f32 %v665, 0.0
    %v743 = vmax.f32 %v554, 0.0
    %v744 = vmax.f32 %v556, 0.0
    %v745 = vmax.f32 %v667, 0.0
    %v746 = vmax.f32 %v669, 0.0
    %v747 = vmax.f32 %v560, 0.0
    %v748 = vmax.f32 %v562, 0.0
    %v749 = vmax.f32 %v673, 0.0
    %v750 = vmax.f32 %v675, 0.0
    %v751 = vmax.f32 %v564, 0.0
    %v752 = vmax.f32 %v566, 0.0
    %v753 = vmax.f32 %v677, 0.0
    %v754 = vmax.f32 %v679, 0.0
    %v755 = vmax.f32 %v570, 0.0
    %v756 = vmax.f32 %v572, 0.0
    %v757 = vmax.f32 %v683, 0.0
    %v758 = vmax.f32 %v685, 0.0
    %v759 = vmax.f32 %v574, 0.0
    %v760 = vmax.f32 %v576, 0.0
    %v761 = vmax.f32 %v687, 0.0
    %v762 = vmax.f32 %v689, 0.0
    %v763 = vmax.f32 %v580, 0.0
    %v764 = vmax.f32 %v582, 0.0
    %v765 = vmax.f32 %v693, 0.0
    %v766 = vmax.f32 %v695, 0.0
    %v767 = vmax.f32 %v584, 0.0
    %v768 = vmax.f32 %v586, 0.0
    %v769 = vmax.f32 %v697, 0.0
    %v770 = vmax.f32 %v699, 0.0
    %v771 = vmax.f32 %v590, 0.0
    %v772 = vmax.f32 %v592, 0.0
    %v773 = vmax.f32 %v703, 0.0
    %v774 = vmax.f32 %v705, 0.0
    %v775 = vmax.f32 %v594, 0.0
    %v776 = vmax.f32 %v596, 0.0
    %v777 = vmax.f32 %v707, 0.0
    %v778 = vmax.f32 %v709, 0.0
    %v779 = vmax.f32 %v600, 0.0
    %v780 = vmax.f32 %v602, 0.0
    %v781 = vmax.f32 %v713, 0.0
    %v782 = vmax.f32 %v715, 0.0
    %v783 = vmax.f32 %v604, 0.0
    %v784 = vmax.f32 %v606, 0.0
    %v785 = vmax.f32 %v717, 0.0
    %v786 = vmax.f32 %v719, 0.0
    %v787 = vmax.f32 %v610, 0.0
    %v788 = vmax.f32 %v612, 0.0
    %v789 = vmax.f32 %v723, 0.0
    %v790 = vmax.f32 %v725, 0.0
    %v791 = vmax.f32 %v614, 0.0
    %v792 = vmax.f32 %v616, 0.0
    %v793 = vmax.f32 %v727, 0.0
    %v794 = vmax.f32 %v729, 0.0
    %v795 = vpack.c.bf16 %v735, %v731
    %v796 = vpack.c.bf16 %v736, %v732
    %v797 = vpack.c.bf16 %v737, %v733
    %v798 = vpack.c.bf16 %v738, %v734
    %v799 = vpack.c.bf16 %v743, %v739
    %v800 = vpack.c.bf16 %v744, %v740
    %v801 = vpack.c.bf16 %v745, %v741
    %v802 = vpack.c.bf16 %v746, %v742
    %v803 = vpack.c.bf16 %v751, %v747
    %v804 = vpack.c.bf16 %v752, %v748
    %v805 = vpack.c.bf16 %v753, %v749
    %v806 = vpack.c.bf16 %v754, %v750
    %v807 = vpack.c.bf16 %v759, %v755
    %v808 = vpack.c.bf16 %v760, %v756
    %v809 = vpack.c.bf16 %v761, %v757
    %v810 = vpack.c.bf16 %v762, %v758
    %v811 = vpack.c.bf16 %v767, %v763
    %v812 = vpack.c.bf16 %v768, %v764
    %v813 = vpack.c.bf16 %v769, %v765
    %v814 = vpack.c.bf16 %v770, %v766
    %v815 = vpack.c.bf16 %v775, %v771
    %v816 = vpack.c.bf16 %v776, %v772
    %v817 = vpack.c.bf16 %v777, %v773
    %v818 = vpack.c.bf16 %v778, %v774
    %v819 = vpack.c.bf16 %v783, %v779
    %v820 = vpack.c.bf16 %v784, %v780
    %v821 = vpack.c.bf16 %v785, %v781
    %v822 = vpack.c.bf16 %v786, %v782
    %v823 = vpack.c.bf16 %v791, %v787
    %v824 = vpack.c.bf16 %v792, %v788
    %v825 = vpack.c.bf16 %v793, %v789
    %v826 = vpack.c.bf16 %v794, %v790
    %v859 = vunpack.c.l.b16 %v795
    %v860 = vunpack.c.l.b16 %v796
    %v861 = vunpack.c.l.b16 %v797
    %v862 = vunpack.c.l.b16 %v798
    %v863 = vunpack.c.h.b16 %v795
    %v864 = vunpack.c.h.b16 %v796
    %v865 = vunpack.c.h.b16 %v797
    %v866 = vunpack.c.h.b16 %v798
    %v867 = vunpack.c.l.b16 %v799
    %v868 = vunpack.c.l.b16 %v800
    %v869 = vunpack.c.l.b16 %v801
    %v870 = vunpack.c.l.b16 %v802
    %v871 = vunpack.c.h.b16 %v799
    %v872 = vunpack.c.h.b16 %v800
    %v873 = vunpack.c.h.b16 %v801
    %v874 = vunpack.c.h.b16 %v802
    %v875 = vunpack.c.l.b16 %v803
    %v876 = vunpack.c.l.b16 %v804
    %v877 = vunpack.c.l.b16 %v805
    %v878 = vunpack.c.l.b16 %v806
    %v879 = vunpack.c.h.b16 %v803
    %v880 = vunpack.c.h.b16 %v804
    %v881 = vunpack.c.h.b16 %v805
    %v882 = vunpack.c.h.b16 %v806
    %v883 = vunpack.c.l.b16 %v807
    %v884 = vunpack.c.l.b16 %v808
    %v885 = vunpack.c.l.b16 %v809
    %v886 = vunpack.c.l.b16 %v810
    %v887 = vunpack.c.h.b16 %v807
    %v888 = vunpack.c.h.b16 %v808
    %v889 = vunpack.c.h.b16 %v809
    %v890 = vunpack.c.h.b16 %v810
    %v891 = vunpack.c.l.b16 %v811
    %v892 = vunpack.c.l.b16 %v812
    %v893 = vunpack.c.l.b16 %v813
    %v894 = vunpack.c.l.b16 %v814
    %v895 = vunpack.c.h.b16 %v811
    %v896 = vunpack.c.h.b16 %v812
    %v897 = vunpack.c.h.b16 %v813
    %v898 = vunpack.c.h.b16 %v814
    %v899 = vunpack.c.l.b16 %v815
    %v900 = vunpack.c.l.b16 %v816
    %v901 = vunpack.c.l.b16 %v817
    %v902 = vunpack.c.l.b16 %v818
    %v903 = vunpack.c.h.b16 %v815
    %v904 = vunpack.c.h.b16 %v816
    %v905 = vunpack.c.h.b16 %v817
    %v906 = vunpack.c.h.b16 %v818
    %v907 = vunpack.c.l.b16 %v819
    %v908 = vunpack.c.l.b16 %v820
    %v909 = vunpack.c.l.b16 %v821
    %v910 = vunpack.c.l.b16 %v822
    %v911 = vunpack.c.h.b16 %v819
    %v912 = vunpack.c.h.b16 %v820
    %v913 = vunpack.c.h.b16 %v821
    %v914 = vunpack.c.h.b16 %v822
    %v915 = vunpack.c.l.b16 %v823
    %v916 = vunpack.c.l.b16 %v824
    %v917 = vunpack.c.l.b16 %v825
    %v918 = vunpack.c.l.b16 %v826
    %v919 = vunpack.c.h.b16 %v823
    %v920 = vunpack.c.h.b16 %v824
    %v921 = vunpack.c.h.b16 %v825
    %v922 = vunpack.c.h.b16 %v826
    %v923 = vpack.c.b16 %v860, %v859
    %v924 = vpack.c.b16 %v862, %v861
    %v925 = vpack.c.b16 %v864, %v863
    %v926 = vpack.c.b16 %v866, %v865
    %v927 = vpack.c.b16 %v868, %v867
    %v928 = vpack.c.b16 %v870, %v869
    %v929 = vpack.c.b16 %v872, %v871
    %v930 = vpack.c.b16 %v874, %v873
    %v931 = vpack.c.b16 %v876, %v875
    %v932 = vpack.c.b16 %v878, %v877
    %v933 = vpack.c.b16 %v880, %v879
    %v934 = vpack.c.b16 %v882, %v881
    %v935 = vpack.c.b16 %v884, %v883
    %v936 = vpack.c.b16 %v886, %v885
    %v937 = vpack.c.b16 %v888, %v887
    %v938 = vpack.c.b16 %v890, %v889
    %v939 = vpack.c.b16 %v892, %v891
    %v940 = vpack.c.b16 %v894, %v893
    %v941 = vpack.c.b16 %v896, %v895
    %v942 = vpack.c.b16 %v898, %v897
    %v943 = vpack.c.b16 %v900, %v899
    %v944 = vpack.c.b16 %v902, %v901
    %v945 = vpack.c.b16 %v904, %v903
    %v946 = vpack.c.b16 %v906, %v905
    %v947 = vpack.c.b16 %v908, %v907
    %v948 = vpack.c.b16 %v910, %v909
    %v949 = vpack.c.b16 %v912, %v911
    %v950 = vpack.c.b16 %v914, %v913
    %v951 = vpack.c.b16 %v916, %v915
    %v952 = vpack.c.b16 %v918, %v917
    %v953 = vpack.c.b16 %v920, %v919
    %v954 = vpack.c.b16 %v922, %v921
    %987 = vst [vmem:[%s2] sm:$0xff] %v923
    %988 = vst [vmem:[%s2 + $0x8] sm:$0xff] %v924
    %989 = vst [vmem:[%s2 + $0x10] sm:$0xff] %v925
    %990 = vst [vmem:[%s2 + $0x18] sm:$0xff] %v926
    %991 = vst [vmem:[%s2 + $0x20] sm:$0xff] %v927
    %992 = vst [vmem:[%s2 + $0x28] sm:$0xff] %v928
    %993 = vst [vmem:[%s2 + $0x30] sm:$0xff] %v929
    %994 = vst [vmem:[%s2 + $0x38] sm:$0xff] %v930
    %995 = vst [vmem:[%s2 + $0x40] sm:$0xff] %v931
    %996 = vst [vmem:[%s2 + $0x48] sm:$0xff] %v932
    %997 = vst [vmem:[%s2 + $0x50] sm:$0xff] %v933
    %998 = vst [vmem:[%s2 + $0x58] sm:$0xff] %v934
    %999 = vst [vmem:[%s2 + $0x60] sm:$0xff] %v935
    %1000 = vst [vmem:[%s2 + $0x68] sm:$0xff] %v936
    %1001 = vst [vmem:[%s2 + $0x70] sm:$0xff] %v937
    %1002 = vst [vmem:[%s2 + $0x78] sm:$0xff] %v938
    %1003 = vst [vmem:[%s2 + $0x80] sm:$0xff] %v939
    %1004 = vst [vmem:[%s2 + $0x88] sm:$0xff] %v940
    %1005 = vst [vmem:[%s2 + $0x90] sm:$0xff] %v941
    %1006 = vst [vmem:[%s2 + $0x98] sm:$0xff] %v942
    %1007 = vst [vmem:[%s2 + $0xa0] sm:$0xff] %v943
    %1008 = vst [vmem:[%s2 + $0xa8] sm:$0xff] %v944
    %1009 = vst [vmem:[%s2 + $0xb0] sm:$0xff] %v945
    %1010 = vst [vmem:[%s2 + $0xb8] sm:$0xff] %v946
    %1011 = vst [vmem:[%s2 + $0xc0] sm:$0xff] %v947
    %1012 = vst [vmem:[%s2 + $0xc8] sm:$0xff] %v948
    %1013 = vst [vmem:[%s2 + $0xd0] sm:$0xff] %v949
    %1014 = vst [vmem:[%s2 + $0xd8] sm:$0xff] %v950
    %1015 = vst [vmem:[%s2 + $0xe0] sm:$0xff] %v951
    %1016 = vst [vmem:[%s2 + $0xe8] sm:$0xff] %v952
    %1017 = vst [vmem:[%s2 + $0xf0] sm:$0xff] %v953
    %1018 = vst [vmem:[%s2 + $0xf8] sm:$0xff] %v954
    // Predicated region
    $region14: #{triclops_forward.2} parent=1 // pred_check
      _
    $region15: #{triclops_forward.2} parent=1 // pred_check_branch
      %1020 = sbr.rel (0) target = $region17
    $region16: #{triclops_forward.2} parent=1 // pred_region
      _
    $region17: #{triclops_forward.2} parent=1 // pred_fallthru
      _
    // Predicated region
    $region18: #{triclops_forward.2} parent=1 // pred_check
      _
    $region19: #{triclops_forward.2} parent=1 // pred_check_branch
      %1022 = sbr.rel (0) target = $region21
    $region20: #{triclops_forward.2} parent=1 // pred_region
      _
    $region21: #{triclops_forward.2} parent=1 // pred_fallthru
      _
    %1023 = vsyncpa [#allocation3], 1

</llo_original>
